<compile_context>
chip_gen: v7x
topology: tpu7x:2x2x1
jax: 0.10.0
libtpu: 0.0.40
codegen_flags: <defaults>
</compile_context>

<pallas_src>
import math

import numpy as np
import jax
import jax.numpy as jnp
from jax import lax
from jax.experimental import pallas as pl
from jax.experimental.pallas import tpu as pltpu

# ----------------------------- model hyper-params -----------------------------
N_EMBED = 32          # n_embed
POINT_SIZE = 16       # point_size (N)
LATENT_SIZE = 16      # latent_size
NUM_OF_FEAT = 4       # num_of_feat (C)
NUM_HEADS = 4         # num_heads
MAX_POINT_SIZE = 32   # max_point_size (query-embedding table rows)
WIDTH_MULT = 2        # width_multiplier (encoder hidden width = n_embed * wm)
HEAD_DIM = N_EMBED // NUM_HEADS
HIDDEN = N_EMBED * WIDTH_MULT
BATCH = 2
BN = BATCH * POINT_SIZE


# --------------------------- packed-weight layout ------------------------------
# Every weight / bias / static batch-structure constant lives in one
# (PACK_ROWS, 128) f32 slab; each entry starts at a sublane-aligned
# (multiple-of-8) row offset so static slices are cheap views.
PACK_COLS = 128

_PACK_ENTRIES = [
    ("W_hid",    NUM_OF_FEAT, HIDDEN),
    ("b_hid",    1,           HIDDEN),
    ("W_emb",    HIDDEN,      N_EMBED),
    ("b_emb",    1,           N_EMBED),
    ("W_kv",     N_EMBED,     2 * N_EMBED),   # K | V fused side-by-side in lanes
    ("W_lat",    N_EMBED,     LATENT_SIZE),
    ("b_lat",    1,           LATENT_SIZE),
    ("W_qc",     LATENT_SIZE, N_EMBED),
    ("W_q",      N_EMBED,     N_EMBED),
    ("W_o",      N_EMBED,     NUM_OF_FEAT),   # sliced 128-lane-wide in kernel
    ("b_o",      1,           NUM_OF_FEAT),   # sliced 128-lane-wide in kernel
    ("q_rep",    BN,          N_EMBED),       # q_emb pre-replicated over batch
    ("sel_mean", BATCH,       BN),            # per-batch mean-pool selector (/N)
    ("scat",     BN,          BATCH),         # latent -> per-point broadcast
    ("neg_mask", BN,          BN),            # block-diagonal additive mask
]


def _build_layout():
    layout, off = {}, 0
    for name, rows, cols in _PACK_ENTRIES:
        layout[name] = (off, rows, cols)
        off += ((rows + 7) // 8) * 8          # sublane-align every slab
    return layout, off


PACK_LAYOUT, PACK_ROWS = _build_layout()      # PACK_ROWS is a multiple of 8


def _static_constants(batch, n_points):
    """Trace-time numpy constants encoding the batch structure."""
    bn = batch * n_points
    pb = np.arange(batch, dtype=np.int64)[:, None]
    pj = np.arange(bn, dtype=np.int64)[None, :]
    in_b = ((pj >= pb * n_points) & (pj < (pb + 1) * n_points)).astype(np.float32)
    sel_mean = in_b / np.float32(n_points)              # (B, BN) mean-pool selector
    scat = np.ascontiguousarray(in_b.T)                 # (BN, B) latent scatter
    same = scat @ in_b                                   # (BN, BN) same-batch indicator
    neg_mask = (same - 1.0) * np.float32(1e30)           # 0 inside block, -1e30 outside
    return sel_mean, scat, neg_mask


def pack_params(params, batch=BATCH):
    """Pack all weights/biases/constants into a single (PACK_ROWS, 128) f32 array."""
    sel_mean, scat, neg_mask = _static_constants(batch, POINT_SIZE)
    tensors = dict(params)
    tensors["W_kv"] = jnp.concatenate([params["W_k"], params["W_v"]], axis=1)
    tensors["q_rep"] = jnp.tile(params["q_emb"], (batch, 1))
    tensors["sel_mean"] = jnp.asarray(sel_mean)
    tensors["scat"] = jnp.asarray(scat)
    tensors["neg_mask"] = jnp.asarray(neg_mask)

    buf = jnp.zeros((PACK_ROWS, PACK_COLS), jnp.float32)
    for name, (off, rows, cols) in PACK_LAYOUT.items():
        w = tensors[name].astype(jnp.float32).reshape(rows, cols)
        buf = buf.at[off:off + rows, :cols].set(w)
    return buf


# --------------------------------- the kernel ---------------------------------
def tdr_kernel(x_ref, w_ref, out_ref, loss_ref):
    def w(name, full_lanes=False):
        off, rows, cols = PACK_LAYOUT[name]
        ncols = PACK_COLS if full_lanes else cols
        return w_ref[pl.ds(off, rows), pl.ds(0, ncols)]

    x = x_ref[...]                                                     # (BN, C)
    bn = x.shape[0]

    # ------------------- feature_map_AE: per-point encoder -------------------
    h = jnp.dot(x, w("W_hid"), preferred_element_type=jnp.float32) + w("b_hid")
    h = jnp.maximum(h, 0.0)                                            # ReLU
    emb = (jnp.dot(h, w("W_emb"), preferred_element_type=jnp.float32)
           + w("b_emb"))                                               # (BN, E)

    # fused K / V projection: one matmul, slice lanes
    kv = jnp.dot(emb, w("W_kv"), preferred_element_type=jnp.float32)   # (BN, 2E)
    k_enc = kv[:, :N_EMBED]
    v_enc = kv[:, N_EMBED:2 * N_EMBED]

    # per-batch mean pool via the packed selector (already scaled by 1/N)
    pooled = jnp.dot(w("sel_mean"), emb,
                     preferred_element_type=jnp.float32)               # (B, E)
    latent = (jnp.dot(pooled, w("W_lat"), preferred_element_type=jnp.float32)
              + w("b_lat"))                                            # (B, L)

    # -------------- DynamicDecoder: latent-conditioned cross-attn ------------
    cond = jnp.dot(latent, w("W_qc"), preferred_element_type=jnp.float32)   # (B, E)
    cond_pts = jnp.dot(w("scat"), cond,
                       preferred_element_type=jnp.float32)                  # (BN, E)

    q_in = w("q_rep") + cond_pts                                       # (BN, E)
    q = jnp.dot(q_in, w("W_q"), preferred_element_type=jnp.float32)
    q = q * (1.0 / math.sqrt(HEAD_DIM))                                # hoisted scale

    neg = w("neg_mask")                                                # (BN, BN)

    ho_parts = []
    for hidx in range(NUM_HEADS):        # static head loop: no .T anywhere
        lo = hidx * HEAD_DIM
        qh = q[:, lo:lo + HEAD_DIM]                                    # (BN, Dh)
        kh = k_enc[:, lo:lo + HEAD_DIM]
        vh = v_enc[:, lo:lo + HEAD_DIM]
        s = lax.dot_general(qh, kh, (((1,), (1,)), ((), ())),
                            preferred_element_type=jnp.float32) + neg  # (BN, BN)
        s = s - jnp.max(s, axis=-1, keepdims=True)
        p = jnp.exp(s)
        p = p / jnp.sum(p, axis=-1, keepdims=True)                     # exact softmax
        ho_parts.append(jnp.dot(p, vh, preferred_element_type=jnp.float32))

    ho_all = jnp.concatenate(ho_parts, axis=-1)                        # (BN, E)

    # single lane-dense output projection: W_o/b_o are zero-padded to 128 lanes
    out128 = (jnp.dot(ho_all, w("W_o", full_lanes=True),
                      preferred_element_type=jnp.float32)
              + w("b_o", full_lanes=True))                             # (BN, 128)
    out_ref[...] = out128

    # MSE loss (nn.MSELoss over B*C*N elements) emitted as an SMEM scalar
    diff = out128[:, :NUM_OF_FEAT] - x
    loss_ref[0, 0] = jnp.sum(diff * diff) * (1.0 / (bn * NUM_OF_FEAT))


# --------------------------------- the wrapper ---------------------------------
def tdr_forward(x_bcn, wpack):
    """x_bcn: (B, num_of_feat, point_size) -- same layout as the PyTorch module."""
    B, C, N = x_bcn.shape
    assert C == NUM_OF_FEAT and N == POINT_SIZE
    x_f32 = x_bcn.astype(jnp.float32)
    x_flat = jnp.transpose(x_f32, (0, 2, 1)).reshape(B * N, C)         # (BN, C)

    out128, loss = pl.pallas_call(
        tdr_kernel,
        out_shape=(
            jax.ShapeDtypeStruct((B * N, PACK_COLS), jnp.float32),     # lane-dense
            jax.ShapeDtypeStruct((1, 1), jnp.float32),                 # MSE scalar
        ),
        # single fused invocation: no grid, whole-array blocks, no pipeline
        in_specs=[
            pl.BlockSpec(memory_space=pltpu.MemorySpace.VMEM),         # x
            pl.BlockSpec(memory_space=pltpu.MemorySpace.VMEM),         # packed weights
        ],
        out_specs=(
            pl.BlockSpec(memory_space=pltpu.MemorySpace.VMEM),
            pl.BlockSpec(memory_space=pltpu.MemorySpace.SMEM),
        ),
    )(x_flat, wpack)

    out = jnp.transpose(out128[:, :C].reshape(B, N, C), (0, 2, 1))     # (B, C, N)
    return out, loss[0, 0]


# --------------------------- deterministic param init ---------------------------
def init_params(key):
    ks = jax.random.split(key, 12)
    f32 = jnp.float32

    def lin(k, fan_in, shape):
        return jax.random.normal(k, shape, f32) / jnp.sqrt(jnp.asarray(fan_in, f32))

    # query-embedding table has max_point_size rows; we use the first point_size
    q_table = lin(ks[5], N_EMBED, (MAX_POINT_SIZE, N_EMBED))
    return {
        # feature_map_AE
        "W_hid": lin(ks[0], NUM_OF_FEAT, (NUM_OF_FEAT, HIDDEN)),
        "b_hid": jnp.zeros((1, HIDDEN), f32),
        "W_emb": lin(ks[1], HIDDEN, (HIDDEN, N_EMBED)),
        "b_emb": jnp.zeros((1, N_EMBED), f32),
        "W_k":   lin(ks[2], N_EMBED, (N_EMBED, N_EMBED)),
        "W_v":   lin(ks[3], N_EMBED, (N_EMBED, N_EMBED)),
        "W_lat": lin(ks[4], N_EMBED, (N_EMBED, LATENT_SIZE)),
        "b_lat": jnp.zeros((1, LATENT_SIZE), f32),
        # DynamicDecoder
        "q_emb": q_table[:POINT_SIZE],
        "W_qc":  lin(ks[6], LATENT_SIZE, (LATENT_SIZE, N_EMBED)),
        "W_q":   lin(ks[7], N_EMBED, (N_EMBED, N_EMBED)),
        "W_o":   lin(ks[8], N_EMBED, (N_EMBED, NUM_OF_FEAT)),
        "b_o":   jnp.zeros((1, NUM_OF_FEAT), f32),
    }
    # TODO(synk): exact feature_map_AE / DynamicDecoder internals (bias usage,
    # layer ordering, pooling type) are not in the reference source; this is a
    # faithful encoder -> latent -> cross-attn-decoder reconstruction with
    # matching interface shapes.


if __name__ == "__main__":
    key = jax.random.PRNGKey(0)
    pkey, xkey = jax.random.split(key)
    params = init_params(pkey)
    wpack = pack_params(params)          # one contiguous weight+constant slab, one DMA

    # x: (batch, num_of_feat, point_size) — same layout as the PyTorch module input
    x = jax.random.normal(xkey, (BATCH, NUM_OF_FEAT, POINT_SIZE), jnp.float32)

    out, loss = jax.jit(tdr_forward)(x, wpack)
    jax.block_until_ready((out, loss))

    assert out.shape == x.shape, f"Output shape {out.shape} != input shape {x.shape}"
    assert out.dtype == jnp.float32 and loss.shape == ()
    print("KERNEL_OK")
</pallas_src>

<mosaic_0001>
module attributes {stable_mosaic.version = 11 : i64} {
  func.func @tdr_kernel(%arg0: memref<32x4xf32, #tpu.memory_space<vmem>>, %arg1: memref<352x128xf32, #tpu.memory_space<vmem>>, %arg2: memref<32x128xf32, #tpu.memory_space<vmem>>, %arg3: memref<1x1xf32, #tpu.memory_space<smem>>) attributes {dimension_semantics = [], scalar_prefetch = 0 : i64, scratch_operands = 0 : i64, tpu.core_type = #tpu.core_type<tc>} {
    %c0 = arith.constant 0 : index
    %c0_0 = arith.constant 0 : index
    %0 = vector.load %arg0[%c0, %c0_0] : memref<32x4xf32, #tpu.memory_space<vmem>>, vector<32x4xf32>
    %c0_1 = arith.constant 0 : index
    %c0_2 = arith.constant 0 : index
    %1 = vector.load %arg1[%c0_1, %c0_2] : memref<352x128xf32, #tpu.memory_space<vmem>>, vector<4x64xf32>
    %cst = arith.constant dense<0.000000e+00> : vector<32x64xf32>
    %2 = tpu.matmul %0, %1, %cst {dimension_numbers = #tpu.dot_dimension_numbers<[1], [0], [0], [1], [0, 0, 1, 1], [], []>} : vector<32x4xf32>, vector<4x64xf32>, vector<32x64xf32> -> vector<32x64xf32>
    %c8 = arith.constant 8 : index
    %c0_3 = arith.constant 0 : index
    %3 = vector.load %arg1[%c8, %c0_3] : memref<352x128xf32, #tpu.memory_space<vmem>>, vector<1x64xf32>
    %4 = vector.broadcast %3 : vector<1x64xf32> to vector<32x64xf32>
    %5 = arith.addf %2, %4 : vector<32x64xf32>
    %cst_4 = arith.constant 0.000000e+00 : f32
    %6 = vector.broadcast %cst_4 : f32 to vector<32x64xf32>
    %7 = arith.maximumf %5, %6 : vector<32x64xf32>
    %c16 = arith.constant 16 : index
    %c0_5 = arith.constant 0 : index
    %8 = vector.load %arg1[%c16, %c0_5] : memref<352x128xf32, #tpu.memory_space<vmem>>, vector<64x32xf32>
    %cst_6 = arith.constant dense<0.000000e+00> : vector<32x32xf32>
    %9 = tpu.matmul %7, %8, %cst_6 {dimension_numbers = #tpu.dot_dimension_numbers<[1], [0], [0], [1], [0, 0, 1, 1], [], []>} : vector<32x64xf32>, vector<64x32xf32>, vector<32x32xf32> -> vector<32x32xf32>
    %c80 = arith.constant 80 : index
    %c0_7 = arith.constant 0 : index
    %10 = vector.load %arg1[%c80, %c0_7] : memref<352x128xf32, #tpu.memory_space<vmem>>, vector<1x32xf32>
    %11 = vector.broadcast %10 : vector<1x32xf32> to vector<32x32xf32>
    %12 = arith.addf %9, %11 : vector<32x32xf32>
    %c88 = arith.constant 88 : index
    %c0_8 = arith.constant 0 : index
    %13 = vector.load %arg1[%c88, %c0_8] : memref<352x128xf32, #tpu.memory_space<vmem>>, vector<32x64xf32>
    %cst_9 = arith.constant dense<0.000000e+00> : vector<32x64xf32>
    %14 = tpu.matmul %12, %13, %cst_9 {dimension_numbers = #tpu.dot_dimension_numbers<[1], [0], [0], [1], [0, 0, 1, 1], [], []>} : vector<32x32xf32>, vector<32x64xf32>, vector<32x64xf32> -> vector<32x64xf32>
    %15 = vector.extract_strided_slice %14 {offsets = [0, 0], sizes = [32, 32], strides = [1, 1]} : vector<32x64xf32> to vector<32x32xf32>
    %16 = vector.extract_strided_slice %14 {offsets = [0, 32], sizes = [32, 32], strides = [1, 1]} : vector<32x64xf32> to vector<32x32xf32>
    %c280 = arith.constant 280 : index
    %c0_10 = arith.constant 0 : index
    %17 = vector.load %arg1[%c280, %c0_10] : memref<352x128xf32, #tpu.memory_space<vmem>>, vector<2x32xf32>
    %cst_11 = arith.constant dense<0.000000e+00> : vector<2x32xf32>
    %18 = tpu.matmul %17, %12, %cst_11 {dimension_numbers = #tpu.dot_dimension_numbers<[1], [0], [0], [1], [0, 0, 1, 1], [], []>} : vector<2x32xf32>, vector<32x32xf32>, vector<2x32xf32> -> vector<2x32xf32>
    %c120 = arith.constant 120 : index
    %c0_12 = arith.constant 0 : index
    %19 = vector.load %arg1[%c120, %c0_12] : memref<352x128xf32, #tpu.memory_space<vmem>>, vector<32x16xf32>
    %cst_13 = arith.constant dense<0.000000e+00> : vector<2x16xf32>
    %20 = tpu.matmul %18, %19, %cst_13 {dimension_numbers = #tpu.dot_dimension_numbers<[1], [0], [0], [1], [0, 0, 1, 1], [], []>} : vector<2x32xf32>, vector<32x16xf32>, vector<2x16xf32> -> vector<2x16xf32>
    %c152 = arith.constant 152 : index
    %c0_14 = arith.constant 0 : index
    %21 = vector.load %arg1[%c152, %c0_14] : memref<352x128xf32, #tpu.memory_space<vmem>>, vector<1x16xf32>
    %22 = vector.broadcast %21 : vector<1x16xf32> to vector<2x16xf32>
    %23 = arith.addf %20, %22 : vector<2x16xf32>
    %c160 = arith.constant 160 : index
    %c0_15 = arith.constant 0 : index
    %24 = vector.load %arg1[%c160, %c0_15] : memref<352x128xf32, #tpu.memory_space<vmem>>, vector<16x32xf32>
    %cst_16 = arith.constant dense<0.000000e+00> : vector<2x32xf32>
    %25 = tpu.matmul %23, %24, %cst_16 {dimension_numbers = #tpu.dot_dimension_numbers<[1], [0], [0], [1], [0, 0, 1, 1], [], []>} : vector<2x16xf32>, vector<16x32xf32>, vector<2x32xf32> -> vector<2x32xf32>
    %c288 = arith.constant 288 : index
    %c0_17 = arith.constant 0 : index
    %26 = vector.load %arg1[%c288, %c0_17] : memref<352x128xf32, #tpu.memory_space<vmem>>, vector<32x2xf32>
    %cst_18 = arith.constant dense<0.000000e+00> : vector<32x32xf32>
    %27 = tpu.matmul %26, %25, %cst_18 {dimension_numbers = #tpu.dot_dimension_numbers<[1], [0], [0], [1], [0, 0, 1, 1], [], []>} : vector<32x2xf32>, vector<2x32xf32>, vector<32x32xf32> -> vector<32x32xf32>
    %c248 = arith.constant 248 : index
    %c0_19 = arith.constant 0 : index
    %28 = vector.load %arg1[%c248, %c0_19] : memref<352x128xf32, #tpu.memory_space<vmem>>, vector<32x32xf32>
    %29 = arith.addf %28, %27 : vector<32x32xf32>
    %c176 = arith.constant 176 : index
    %c0_20 = arith.constant 0 : index
    %30 = vector.load %arg1[%c176, %c0_20] : memref<352x128xf32, #tpu.memory_space<vmem>>, vector<32x32xf32>
    %cst_21 = arith.constant dense<0.000000e+00> : vector<32x32xf32>
    %31 = tpu.matmul %29, %30, %cst_21 {dimension_numbers = #tpu.dot_dimension_numbers<[1], [0], [0], [1], [0, 0, 1, 1], [], []>} : vector<32x32xf32>, vector<32x32xf32>, vector<32x32xf32> -> vector<32x32xf32>
    %cst_22 = arith.constant 0.353553385 : f32
    %32 = vector.broadcast %cst_22 : f32 to vector<32x32xf32>
    %33 = arith.mulf %31, %32 : vector<32x32xf32>
    %c320 = arith.constant 320 : index
    %c0_23 = arith.constant 0 : index
    %34 = vector.load %arg1[%c320, %c0_23] : memref<352x128xf32, #tpu.memory_space<vmem>>, vector<32x32xf32>
    %35 = vector.extract_strided_slice %33 {offsets = [0, 0], sizes = [32, 8], strides = [1, 1]} : vector<32x32xf32> to vector<32x8xf32>
    %36 = vector.extract_strided_slice %15 {offsets = [0, 0], sizes = [32, 8], strides = [1, 1]} : vector<32x32xf32> to vector<32x8xf32>
    %37 = vector.extract_strided_slice %16 {offsets = [0, 0], sizes = [32, 8], strides = [1, 1]} : vector<32x32xf32> to vector<32x8xf32>
    %cst_24 = arith.constant dense<0.000000e+00> : vector<32x32xf32>
    %38 = tpu.matmul %35, %36, %cst_24 {dimension_numbers = #tpu.dot_dimension_numbers<[1], [1], [0], [0], [0, 0, 1, 0], [], []>} : vector<32x8xf32>, vector<32x8xf32>, vector<32x32xf32> -> vector<32x32xf32>
    %39 = arith.addf %38, %34 : vector<32x32xf32>
    %cst_25 = arith.constant dense<0xFF800000> : vector<32xf32>
    %40 = vector.multi_reduction <maximumf>, %39, %cst_25 [1] : vector<32x32xf32> to vector<32xf32>
    %41 = vector.shape_cast %40 : vector<32xf32> to vector<32x1xf32>
    %42 = vector.broadcast %41 : vector<32x1xf32> to vector<32x32xf32>
    %43 = arith.subf %39, %42 : vector<32x32xf32>
    %44 = math.exp %43 : vector<32x32xf32>
    %cst_26 = arith.constant dense<0.000000e+00> : vector<32xf32>
    %45 = vector.multi_reduction <add>, %44, %cst_26 [1] : vector<32x32xf32> to vector<32xf32>
    %46 = vector.shape_cast %45 : vector<32xf32> to vector<32x1xf32>
    %47 = vector.broadcast %46 : vector<32x1xf32> to vector<32x32xf32>
    %48 = arith.divf %44, %47 : vector<32x32xf32>
    %cst_27 = arith.constant dense<0.000000e+00> : vector<32x8xf32>
    %49 = tpu.matmul %48, %37, %cst_27 {dimension_numbers = #tpu.dot_dimension_numbers<[1], [0], [0], [1], [0, 0, 1, 1], [], []>} : vector<32x32xf32>, vector<32x8xf32>, vector<32x8xf32> -> vector<32x8xf32>
    %50 = vector.extract_strided_slice %33 {offsets = [0, 8], sizes = [32, 8], strides = [1, 1]} : vector<32x32xf32> to vector<32x8xf32>
    %51 = vector.extract_strided_slice %15 {offsets = [0, 8], sizes = [32, 8], strides = [1, 1]} : vector<32x32xf32> to vector<32x8xf32>
    %52 = vector.extract_strided_slice %16 {offsets = [0, 8], sizes = [32, 8], strides = [1, 1]} : vector<32x32xf32> to vector<32x8xf32>
    %cst_28 = arith.constant dense<0.000000e+00> : vector<32x32xf32>
    %53 = tpu.matmul %50, %51, %cst_28 {dimension_numbers = #tpu.dot_dimension_numbers<[1], [1], [0], [0], [0, 0, 1, 0], [], []>} : vector<32x8xf32>, vector<32x8xf32>, vector<32x32xf32> -> vector<32x32xf32>
    %54 = arith.addf %53, %34 : vector<32x32xf32>
    %cst_29 = arith.constant dense<0xFF800000> : vector<32xf32>
    %55 = vector.multi_reduction <maximumf>, %54, %cst_29 [1] : vector<32x32xf32> to vector<32xf32>
    %56 = vector.shape_cast %55 : vector<32xf32> to vector<32x1xf32>
    %57 = vector.broadcast %56 : vector<32x1xf32> to vector<32x32xf32>
    %58 = arith.subf %54, %57 : vector<32x32xf32>
    %59 = math.exp %58 : vector<32x32xf32>
    %cst_30 = arith.constant dense<0.000000e+00> : vector<32xf32>
    %60 = vector.multi_reduction <add>, %59, %cst_30 [1] : vector<32x32xf32> to vector<32xf32>
    %61 = vector.shape_cast %60 : vector<32xf32> to vector<32x1xf32>
    %62 = vector.broadcast %61 : vector<32x1xf32> to vector<32x32xf32>
    %63 = arith.divf %59, %62 : vector<32x32xf32>
    %cst_31 = arith.constant dense<0.000000e+00> : vector<32x8xf32>
    %64 = tpu.matmul %63, %52, %cst_31 {dimension_numbers = #tpu.dot_dimension_numbers<[1], [0], [0], [1], [0, 0, 1, 1], [], []>} : vector<32x32xf32>, vector<32x8xf32>, vector<32x8xf32> -> vector<32x8xf32>
    %65 = vector.extract_strided_slice %33 {offsets = [0, 16], sizes = [32, 8], strides = [1, 1]} : vector<32x32xf32> to vector<32x8xf32>
    %66 = vector.extract_strided_slice %15 {offsets = [0, 16], sizes = [32, 8], strides = [1, 1]} : vector<32x32xf32> to vector<32x8xf32>
    %67 = vector.extract_strided_slice %16 {offsets = [0, 16], sizes = [32, 8], strides = [1, 1]} : vector<32x32xf32> to vector<32x8xf32>
    %cst_32 = arith.constant dense<0.000000e+00> : vector<32x32xf32>
    %68 = tpu.matmul %65, %66, %cst_32 {dimension_numbers = #tpu.dot_dimension_numbers<[1], [1], [0], [0], [0, 0, 1, 0], [], []>} : vector<32x8xf32>, vector<32x8xf32>, vector<32x32xf32> -> vector<32x32xf32>
    %69 = arith.addf %68, %34 : vector<32x32xf32>
    %cst_33 = arith.constant dense<0xFF800000> : vector<32xf32>
    %70 = vector.multi_reduction <maximumf>, %69, %cst_33 [1] : vector<32x32xf32> to vector<32xf32>
    %71 = vector.shape_cast %70 : vector<32xf32> to vector<32x1xf32>
    %72 = vector.broadcast %71 : vector<32x1xf32> to vector<32x32xf32>
    %73 = arith.subf %69, %72 : vector<32x32xf32>
    %74 = math.exp %73 : vector<32x32xf32>
    %cst_34 = arith.constant dense<0.000000e+00> : vector<32xf32>
    %75 = vector.multi_reduction <add>, %74, %cst_34 [1] : vector<32x32xf32> to vector<32xf32>
    %76 = vector.shape_cast %75 : vector<32xf32> to vector<32x1xf32>
    %77 = vector.broadcast %76 : vector<32x1xf32> to vector<32x32xf32>
    %78 = arith.divf %74, %77 : vector<32x32xf32>
    %cst_35 = arith.constant dense<0.000000e+00> : vector<32x8xf32>
    %79 = tpu.matmul %78, %67, %cst_35 {dimension_numbers = #tpu.dot_dimension_numbers<[1], [0], [0], [1], [0, 0, 1, 1], [], []>} : vector<32x32xf32>, vector<32x8xf32>, vector<32x8xf32> -> vector<32x8xf32>
    %80 = vector.extract_strided_slice %33 {offsets = [0, 24], sizes = [32, 8], strides = [1, 1]} : vector<32x32xf32> to vector<32x8xf32>
    %81 = vector.extract_strided_slice %15 {offsets = [0, 24], sizes = [32, 8], strides = [1, 1]} : vector<32x32xf32> to vector<32x8xf32>
    %82 = vector.extract_strided_slice %16 {offsets = [0, 24], sizes = [32, 8], strides = [1, 1]} : vector<32x32xf32> to vector<32x8xf32>
    %cst_36 = arith.constant dense<0.000000e+00> : vector<32x32xf32>
    %83 = tpu.matmul %80, %81, %cst_36 {dimension_numbers = #tpu.dot_dimension_numbers<[1], [1], [0], [0], [0, 0, 1, 0], [], []>} : vector<32x8xf32>, vector<32x8xf32>, vector<32x32xf32> -> vector<32x32xf32>
    %84 = arith.addf %83, %34 : vector<32x32xf32>
    %cst_37 = arith.constant dense<0xFF800000> : vector<32xf32>
    %85 = vector.multi_reduction <maximumf>, %84, %cst_37 [1] : vector<32x32xf32> to vector<32xf32>
    %86 = vector.shape_cast %85 : vector<32xf32> to vector<32x1xf32>
    %87 = vector.broadcast %86 : vector<32x1xf32> to vector<32x32xf32>
    %88 = arith.subf %84, %87 : vector<32x32xf32>
    %89 = math.exp %88 : vector<32x32xf32>
    %cst_38 = arith.constant dense<0.000000e+00> : vector<32xf32>
    %90 = vector.multi_reduction <add>, %89, %cst_38 [1] : vector<32x32xf32> to vector<32xf32>
    %91 = vector.shape_cast %90 : vector<32xf32> to vector<32x1xf32>
    %92 = vector.broadcast %91 : vector<32x1xf32> to vector<32x32xf32>
    %93 = arith.divf %89, %92 : vector<32x32xf32>
    %cst_39 = arith.constant dense<0.000000e+00> : vector<32x8xf32>
    %94 = tpu.matmul %93, %82, %cst_39 {dimension_numbers = #tpu.dot_dimension_numbers<[1], [0], [0], [1], [0, 0, 1, 1], [], []>} : vector<32x32xf32>, vector<32x8xf32>, vector<32x8xf32> -> vector<32x8xf32>
    %95 = tpu.concatenate %49, %64, %79, %94 in 1 : vector<32x8xf32>, vector<32x8xf32>, vector<32x8xf32>, vector<32x8xf32> -> vector<32x32xf32>
    %c208 = arith.constant 208 : index
    %c0_40 = arith.constant 0 : index
    %96 = vector.load %arg1[%c208, %c0_40] : memref<352x128xf32, #tpu.memory_space<vmem>>, vector<32x128xf32>
    %cst_41 = arith.constant dense<0.000000e+00> : vector<32x128xf32>
    %97 = tpu.matmul %95, %96, %cst_41 {dimension_numbers = #tpu.dot_dimension_numbers<[1], [0], [0], [1], [0, 0, 1, 1], [], []>} : vector<32x32xf32>, vector<32x128xf32>, vector<32x128xf32> -> vector<32x128xf32>
    %c240 = arith.constant 240 : index
    %c0_42 = arith.constant 0 : index
    %98 = vector.load %arg1[%c240, %c0_42] : memref<352x128xf32, #tpu.memory_space<vmem>>, vector<1x128xf32>
    %99 = vector.broadcast %98 : vector<1x128xf32> to vector<32x128xf32>
    %100 = arith.addf %97, %99 : vector<32x128xf32>
    %c0_43 = arith.constant 0 : index
    %c0_44 = arith.constant 0 : index
    %101 = vector.load %arg2[%c0_43, %c0_44] : memref<32x128xf32, #tpu.memory_space<vmem>>, vector<32x128xf32>
    tpu.vector_store %arg2[%c0_43, %c0_44], %100 {strides = array<i32>} : memref<32x128xf32, #tpu.memory_space<vmem>>, vector<32x128xf32>,
    %102 = vector.extract_strided_slice %100 {offsets = [0, 0], sizes = [32, 4], strides = [1, 1]} : vector<32x128xf32> to vector<32x4xf32>
    %103 = arith.subf %102, %0 : vector<32x4xf32>
    %104 = arith.mulf %103, %103 : vector<32x4xf32>
    %105 = vector.shape_cast %104 : vector<32x4xf32> to vector<1x32x4xf32>
    %cst_45 = arith.constant dense<0.000000e+00> : vector<1xf32>
    %106 = vector.multi_reduction <add>, %105, %cst_45 [1, 2] : vector<1x32x4xf32> to vector<1xf32>
    %107 = vector.shape_cast %106 : vector<1xf32> to vector<1x1x1xf32>
    %108 = vector.extract %107[0, 0, 0] : f32 from vector<1x1x1xf32>
    %cst_46 = arith.constant 7.812500e-03 : f32
    %109 = arith.mulf %108, %cst_46 : f32
    %c0_47 = arith.constant 0 : index
    %c0_48 = arith.constant 0 : index
    %110 = memref.load %arg3[%c0_47, %c0_48] : memref<1x1xf32, #tpu.memory_space<smem>>
    memref.store %109, %arg3[%c0_47, %c0_48] : memref<1x1xf32, #tpu.memory_space<smem>>
    return
  }
}

</mosaic_0001>

<llo_original>
// kernel: tdr_forward.1
$region0: #{tdr_forward.1}
  #allocation0 [shape = 'u32[]', space=smem, size = 0x4, offset = 0x4, fixed_abs, tag = 'smem constant byte address 0x4 - core index']
  #allocation1 [shape = 'u32[144,128]{1,0:T(1,128)}', space=vmem, size = 0x12000, scoped, tag = 'internal scratch']
  %s0 = inlined_call_operand.vmem [shape: f32[32,4], index: 0, kind: input, shape index: {}]
  %s1 = inlined_call_operand.hbm [shape: f32[352,128], index: 1, kind: input, shape index: {}]
  %s2 = inlined_call_operand.vmem [shape: f32[32,128], index: 2, kind: output, shape index: {0}]
  %s3 = inlined_call_operand.hbm [shape: f32[1,1], index: 3, kind: output, shape index: {1}]
  %4 = xla_tuple %s2, %s3
  %s5 = sld [smem:[#allocation0]]
  $region30: #{tdr_forward.1} parent=0
    _
  %s7 = ssub.s32 1, %s5
  %s8 = scalar_select 0, %s7, %s5
  $region1: #{tdr_forward.1} parent=0
    #allocation2 [shape = 'u8[180224]{0}', space=vmem, size = 0x2c000, scoped, tag = 'input window, operand 1, single buffered']
    #allocation3 [shape = 's32[1]{0}', space=sflag, size = 0x4, scoped, tag = 'scoped memory for tdr_forward.1']
    #allocation4 [shape = 's32[1]{0}', space=sflag, size = 0x4, scoped, tag = 'scoped memory for tdr_forward.1']
    #allocation5 [shape = 'u8[512]{0}', space=smem, size = 0x200, scoped, tag = 'output window, operand 1, single buffered']
    %9 = vsyncpa [#allocation3], 0
    %10 = vsyncpa [#allocation4], 0
    // Predicated region
    $region2: #{tdr_forward.1} parent=1 // pred_check
      _
    $region3: #{tdr_forward.1} parent=1 // pred_check_branch
      %12 = sbr.rel (0) target = $region5
    $region4: #{tdr_forward.1} parent=1 // pred_region
      _
    $region5: #{tdr_forward.1} parent=1 // pred_fallthru
      _
    // Predicated region
    $region6: #{tdr_forward.1} parent=1 // pred_check
      _
    $region7: #{tdr_forward.1} parent=1 // pred_check_branch
      %14 = sbr.rel (0) target = $region9
    $region8: #{tdr_forward.1} parent=1 // pred_region
      %s16 = ssub.s32 5632, 5632
      %17 = vsyncadd [#allocation3], %s16
      %s18 = sshll.u32 [#allocation2], 4
      %s19 = int_to_ptr.vmem [resolvable:$true] %s18
      %24 = dma.hbm_to_vmem [thread:$0]  %s1, 5632, %s19, [#allocation3], 128, 128, 8
    $region9: #{tdr_forward.1} parent=1 // pred_fallthru
      _
    // Predicated region
    $region10: #{tdr_forward.1} parent=1 // pred_check
      _
    $region11: #{tdr_forward.1} parent=1 // pred_check_branch
      %26 = sbr.rel (0) target = $region13
    $region12: #{tdr_forward.1} parent=1 // pred_region
      %27 = dma.done [#allocation3], 5632
    $region13: #{tdr_forward.1} parent=1 // pred_fallthru
      _
    %v28 = vld [vmem:[%s0] sm:$0xff]
    %v29 = vld [vmem:[%s0 + $0x8] sm:$0xff]
    %v30 = vld [vmem:[%s0 + $0x10] sm:$0xff]
    %v31 = vld [vmem:[%s0 + $0x18] sm:$0xff]
    %v32 = vld [vmem:[#allocation2] sm:$0xf]
    %v33 = vld [vmem:[#allocation2 + $0x8] sm:$0x1]
    %v34 = vlaneseq
    %v35 = vshrl.u32 %v34, 7
    %v36 = vsub.s32 0, %v35
    %v37 = vrot.slane %v33, %v36
    %vm38 = vcmask 31744
    %v40 = vsel %vm38, %v28, 0
    %v43 = vsel %vm38, %v29, 0
    %v46 = vsel %vm38, %v30, 0
    %v49 = vsel %vm38, %v31, 0
    %vm51 = vcmask 1043456
    %v53 = vsel %vm51, %v32, 0
    %55 = vmatprep.subr.mxu0 0.0
    %56 = vmatpush1.msra.mxu0 %v53
    %57 = vmatprep.subr.mxu0 0.0
    %58 = vmatpush1.msra.mxu0 0.0
    %59 = vmatprep.subr.mxu0 0.0
    %60 = vmatpush1.msra.mxu0 0.0
    %61 = vmatprep.subr.mxu0 0.0
    %62 = vmatpush1.msra.mxu0 0.0
    %63 = vmatprep.subr.mxu0 0.0
    %64 = vmatpush1.msra.mxu0 0.0
    %65 = vmatprep.subr.mxu0 0.0
    %66 = vmatpush1.msra.mxu0 0.0
    %67 = vmatprep.subr.mxu0 0.0
    %68 = vmatpush1.msra.mxu0 0.0
    %69 = vmatprep.subr.mxu0 0.0
    %70 = vmatpush1.msra.mxu0 0.0
    %71 = vmatprep.subr.mxu0 0.0
    %72 = vmatpush1.msra.mxu0 0.0
    %73 = vmatprep.subr.mxu0 0.0
    %74 = vmatpush1.msra.mxu0 0.0
    %75 = vmatprep.subr.mxu0 0.0
    %76 = vmatpush1.msra.mxu0 0.0
    %77 = vmatprep.subr.mxu0 0.0
    %78 = vmatpush1.msra.mxu0 0.0
    %79 = vmatprep.subr.mxu0 0.0
    %80 = vmatpush1.msra.mxu0 0.0
    %81 = vmatprep.subr.mxu0 0.0
    %82 = vmatpush1.msra.mxu0 0.0
    %83 = vmatprep.subr.mxu0 0.0
    %84 = vmatpush1.msra.mxu0 0.0
    %85 = vmatprep.subr.mxu0 0.0
    %86 = vmatpush1.msra.mxu0 0.0
    %87 = vmatprep.subr.mxu0 0.0
    %88 = vmatpush1.msra.mxu0 0.0
    %89 = vmatprep.subr.mxu0 0.0
    %90 = vmatpush1.msra.mxu0 0.0
    %91 = vmatprep.subr.mxu0 0.0
    %92 = vmatpush1.msra.mxu0 0.0
    %93 = vmatprep.subr.mxu0 0.0
    %94 = vmatpush1.msra.mxu0 0.0
    %95 = vmatprep.subr.mxu0 0.0
    %96 = vmatpush1.msra.mxu0 0.0
    %97 = vmatprep.subr.mxu0 0.0
    %98 = vmatpush1.msra.mxu0 0.0
    %99 = vmatprep.subr.mxu0 0.0
    %100 = vmatpush1.msra.mxu0 0.0
    %101 = vmatprep.subr.mxu0 0.0
    %102 = vmatpush1.msra.mxu0 0.0
    %103 = vmatprep.subr.mxu0 0.0
    %104 = vmatpush1.msra.mxu0 0.0
    %105 = vmatprep.subr.mxu0 0.0
    %106 = vmatpush1.msra.mxu0 0.0
    %107 = vmatprep.subr.mxu0 0.0
    %108 = vmatpush1.msra.mxu0 0.0
    %109 = vmatprep.subr.mxu0 0.0
    %110 = vmatpush1.msra.mxu0 0.0
    %111 = vmatprep.subr.mxu0 0.0
    %112 = vmatpush1.msra.mxu0 0.0
    %113 = vmatprep.subr.mxu0 0.0
    %114 = vmatpush1.msra.mxu0 0.0
    %115 = vmatprep.subr.mxu0 0.0
    %116 = vmatpush1.msra.mxu0 0.0
    %117 = vmatprep.subr.mxu0 0.0
    %118 = vmatpush1.msra.mxu0 0.0
    %119 = vmatprep.mubr.f32.mxu0 0.0
    %120 = vmatmul.mubr.f32.gmra.mrb[0].mxu0 %v40
    %v121 = vpop.f32.mrb[0].mxu0
    %v122 = vadd.f32 %v37, %v121
    %v123 = vpop.f32.mrb[0].mxu0
    %124 = vmatprep.mubr.f32.mxu0 0.0
    %125 = vmatmul.mubr.f32.gmra.mrb[0].mxu0 %v43
    %v126 = vpop.f32.mrb[0].mxu0
    %v127 = vadd.f32 %v37, %v126
    %v128 = vpop.f32.mrb[0].mxu0
    %129 = vmatprep.mubr.f32.mxu0 0.0
    %130 = vmatmul.mubr.f32.gmra.mrb[0].mxu0 %v46
    %v131 = vpop.f32.mrb[0].mxu0
    %v132 = vadd.f32 %v37, %v131
    %v133 = vpop.f32.mrb[0].mxu0
    %134 = vmatprep.mubr.f32.mxu0 0.0
    %135 = vmatmul.mubr.f32.gmra.mrb[0].mxu0 %v49
    %v136 = vpop.f32.mrb[0].mxu0
    %v137 = vadd.f32 %v37, %v136
    %v138 = vpop.f32.mrb[0].mxu0
    %139 = vdwg.mxu0
    %v140 = vmax.f32 %v122, 0.0
    %v141 = vmax.f32 %v127, 0.0
    %v142 = vmax.f32 %v132, 0.0
    %v143 = vmax.f32 %v137, 0.0
    %v144 = vld [vmem:[#allocation2 + $0x10] sm:$0xff]
    %v145 = vld [vmem:[#allocation2 + $0x18] sm:$0xff]
    %v146 = vld [vmem:[#allocation2 + $0x20] sm:$0xff]
    %v147 = vld [vmem:[#allocation2 + $0x28] sm:$0xff]
    %v148 = vld [vmem:[#allocation2 + $0x30] sm:$0xff]
    %v149 = vld [vmem:[#allocation2 + $0x38] sm:$0xff]
    %v150 = vld [vmem:[#allocation2 + $0x40] sm:$0xff]
    %v151 = vld [vmem:[#allocation2 + $0x48] sm:$0xff]
    %v152 = vld [vmem:[#allocation2 + $0x50] sm:$0x1]
    %v153 = vlaneseq
    %v154 = vshrl.u32 %v153, 7
    %v155 = vsub.s32 0, %v154
    %v156 = vrot.slane %v152, %v155
    %vm157 = vcmask 523264
    %v159 = vsel %vm157, %v140, 0
    %v162 = vsel %vm157, %v141, 0
    %v165 = vsel %vm157, %v142, 0
    %v168 = vsel %vm157, %v143, 0
    %170 = vmatprep.subr.mxu0 0.0
    %171 = vmatpush1.msra.mxu0 %v144
    %172 = vmatprep.subr.mxu0 0.0
    %173 = vmatpush1.msra.mxu0 %v145
    %174 = vmatprep.subr.mxu0 0.0
    %175 = vmatpush1.msra.mxu0 %v146
    %176 = vmatprep.subr.mxu0 0.0
    %177 = vmatpush1.msra.mxu0 %v147
    %178 = vmatprep.subr.mxu0 0.0
    %179 = vmatpush1.msra.mxu0 %v148
    %180 = vmatprep.subr.mxu0 0.0
    %181 = vmatpush1.msra.mxu0 %v149
    %182 = vmatprep.subr.mxu0 0.0
    %183 = vmatpush1.msra.mxu0 %v150
    %184 = vmatprep.subr.mxu0 0.0
    %185 = vmatpush1.msra.mxu0 %v151
    %186 = vmatprep.subr.mxu0 0.0
    %187 = vmatpush1.msra.mxu0 0.0
    %188 = vmatprep.subr.mxu0 0.0
    %189 = vmatpush1.msra.mxu0 0.0
    %190 = vmatprep.subr.mxu0 0.0
    %191 = vmatpush1.msra.mxu0 0.0
    %192 = vmatprep.subr.mxu0 0.0
    %193 = vmatpush1.msra.mxu0 0.0
    %194 = vmatprep.subr.mxu0 0.0
    %195 = vmatpush1.msra.mxu0 0.0
    %196 = vmatprep.subr.mxu0 0.0
    %197 = vmatpush1.msra.mxu0 0.0
    %198 = vmatprep.subr.mxu0 0.0
    %199 = vmatpush1.msra.mxu0 0.0
    %200 = vmatprep.subr.mxu0 0.0
    %201 = vmatpush1.msra.mxu0 0.0
    %202 = vmatprep.subr.mxu0 0.0
    %203 = vmatpush1.msra.mxu0 0.0
    %204 = vmatprep.subr.mxu0 0.0
    %205 = vmatpush1.msra.mxu0 0.0
    %206 = vmatprep.subr.mxu0 0.0
    %207 = vmatpush1.msra.mxu0 0.0
    %208 = vmatprep.subr.mxu0 0.0
    %209 = vmatpush1.msra.mxu0 0.0
    %210 = vmatprep.subr.mxu0 0.0
    %211 = vmatpush1.msra.mxu0 0.0
    %212 = vmatprep.subr.mxu0 0.0
    %213 = vmatpush1.msra.mxu0 0.0
    %214 = vmatprep.subr.mxu0 0.0
    %215 = vmatpush1.msra.mxu0 0.0
    %216 = vmatprep.subr.mxu0 0.0
    %217 = vmatpush1.msra.mxu0 0.0
    %218 = vmatprep.subr.mxu0 0.0
    %219 = vmatpush1.msra.mxu0 0.0
    %220 = vmatprep.subr.mxu0 0.0
    %221 = vmatpush1.msra.mxu0 0.0
    %222 = vmatprep.subr.mxu0 0.0
    %223 = vmatpush1.msra.mxu0 0.0
    %224 = vmatprep.subr.mxu0 0.0
    %225 = vmatpush1.msra.mxu0 0.0
    %226 = vmatprep.subr.mxu0 0.0
    %227 = vmatpush1.msra.mxu0 0.0
    %228 = vmatprep.subr.mxu0 0.0
    %229 = vmatpush1.msra.mxu0 0.0
    %230 = vmatprep.subr.mxu0 0.0
    %231 = vmatpush1.msra.mxu0 0.0
    %232 = vmatprep.subr.mxu0 0.0
    %233 = vmatpush1.msra.mxu0 0.0
    %234 = vmatprep.mubr.f32.mxu0 0.0
    %235 = vmatmul.mubr.f32.gmra.mrb[0].mxu0 %v159
    %v236 = vpop.f32.mrb[0].mxu0
    %v237 = vadd.f32 %v156, %v236
    %v238 = vpop.f32.mrb[0].mxu0
    %239 = vmatprep.mubr.f32.mxu0 0.0
    %240 = vmatmul.mubr.f32.gmra.mrb[0].mxu0 %v162
    %v241 = vpop.f32.mrb[0].mxu0
    %v242 = vadd.f32 %v156, %v241
    %v243 = vpop.f32.mrb[0].mxu0
    %244 = vmatprep.mubr.f32.mxu0 0.0
    %245 = vmatmul.mubr.f32.gmra.mrb[0].mxu0 %v165
    %v246 = vpop.f32.mrb[0].mxu0
    %v247 = vadd.f32 %v156, %v246
    %v248 = vpop.f32.mrb[0].mxu0
    %249 = vmatprep.mubr.f32.mxu0 0.0
    %250 = vmatmul.mubr.f32.gmra.mrb[0].mxu0 %v168
    %v251 = vpop.f32.mrb[0].mxu0
    %v252 = vadd.f32 %v156, %v251
    %v253 = vpop.f32.mrb[0].mxu0
    %254 = vdwg.mxu0
    %v255 = vld [vmem:[#allocation2 + $0x58] sm:$0xff]
    %v256 = vld [vmem:[#allocation2 + $0x60] sm:$0xff]
    %v257 = vld [vmem:[#allocation2 + $0x68] sm:$0xff]
    %v258 = vld [vmem:[#allocation2 + $0x70] sm:$0xff]
    %vm259 = vcmask 261120
    %v261 = vsel %vm259, %v237, 0
    %v264 = vsel %vm259, %v242, 0
    %v267 = vsel %vm259, %v247, 0
    %v270 = vsel %vm259, %v252, 0
    %272 = vmatprep.subr.mxu0 0.0
    %273 = vmatpush1.msra.mxu0 %v255
    %274 = vmatprep.subr.mxu0 0.0
    %275 = vmatpush1.msra.mxu0 %v256
    %276 = vmatprep.subr.mxu0 0.0
    %277 = vmatpush1.msra.mxu0 %v257
    %278 = vmatprep.subr.mxu0 0.0
    %279 = vmatpush1.msra.mxu0 %v258
    %280 = vmatprep.subr.mxu0 0.0
    %281 = vmatpush1.msra.mxu0 0.0
    %282 = vmatprep.subr.mxu0 0.0
    %283 = vmatpush1.msra.mxu0 0.0
    %284 = vmatprep.subr.mxu0 0.0
    %285 = vmatpush1.msra.mxu0 0.0
    %286 = vmatprep.subr.mxu0 0.0
    %287 = vmatpush1.msra.mxu0 0.0
    %288 = vmatprep.subr.mxu0 0.0
    %289 = vmatpush1.msra.mxu0 0.0
    %290 = vmatprep.subr.mxu0 0.0
    %291 = vmatpush1.msra.mxu0 0.0
    %292 = vmatprep.subr.mxu0 0.0
    %293 = vmatpush1.msra.mxu0 0.0
    %294 = vmatprep.subr.mxu0 0.0
    %295 = vmatpush1.msra.mxu0 0.0
    %296 = vmatprep.subr.mxu0 0.0
    %297 = vmatpush1.msra.mxu0 0.0
    %298 = vmatprep.subr.mxu0 0.0
    %299 = vmatpush1.msra.mxu0 0.0
    %300 = vmatprep.subr.mxu0 0.0
    %301 = vmatpush1.msra.mxu0 0.0
    %302 = vmatprep.subr.mxu0 0.0
    %303 = vmatpush1.msra.mxu0 0.0
    %304 = vmatprep.subr.mxu0 0.0
    %305 = vmatpush1.msra.mxu0 0.0
    %306 = vmatprep.subr.mxu0 0.0
    %307 = vmatpush1.msra.mxu0 0.0
    %308 = vmatprep.subr.mxu0 0.0
    %309 = vmatpush1.msra.mxu0 0.0
    %310 = vmatprep.subr.mxu0 0.0
    %311 = vmatpush1.msra.mxu0 0.0
    %312 = vmatprep.subr.mxu0 0.0
    %313 = vmatpush1.msra.mxu0 0.0
    %314 = vmatprep.subr.mxu0 0.0
    %315 = vmatpush1.msra.mxu0 0.0
    %316 = vmatprep.subr.mxu0 0.0
    %317 = vmatpush1.msra.mxu0 0.0
    %318 = vmatprep.subr.mxu0 0.0
    %319 = vmatpush1.msra.mxu0 0.0
    %320 = vmatprep.subr.mxu0 0.0
    %321 = vmatpush1.msra.mxu0 0.0
    %322 = vmatprep.subr.mxu0 0.0
    %323 = vmatpush1.msra.mxu0 0.0
    %324 = vmatprep.subr.mxu0 0.0
    %325 = vmatpush1.msra.mxu0 0.0
    %326 = vmatprep.subr.mxu0 0.0
    %327 = vmatpush1.msra.mxu0 0.0
    %328 = vmatprep.subr.mxu0 0.0
    %329 = vmatpush1.msra.mxu0 0.0
    %330 = vmatprep.subr.mxu0 0.0
    %331 = vmatpush1.msra.mxu0 0.0
    %332 = vmatprep.subr.mxu0 0.0
    %333 = vmatpush1.msra.mxu0 0.0
    %334 = vmatprep.subr.mxu0 0.0
    %335 = vmatpush1.msra.mxu0 0.0
    %336 = vmatprep.mubr.f32.mxu0 0.0
    %337 = vmatmul.mubr.f32.gmra.mrb[0].mxu0 %v261
    %v338 = vpop.f32.mrb[0].mxu0
    %v339 = vadd.f32 0.0, %v338
    %v340 = vpop.f32.mrb[0].mxu0
    %341 = vmatprep.mubr.f32.mxu0 0.0
    %342 = vmatmul.mubr.f32.gmra.mrb[0].mxu0 %v264
    %v343 = vpop.f32.mrb[0].mxu0
    %v344 = vadd.f32 0.0, %v343
    %v345 = vpop.f32.mrb[0].mxu0
    %346 = vmatprep.mubr.f32.mxu0 0.0
    %347 = vmatmul.mubr.f32.gmra.mrb[0].mxu0 %v267
    %v348 = vpop.f32.mrb[0].mxu0
    %v349 = vadd.f32 0.0, %v348
    %v350 = vpop.f32.mrb[0].mxu0
    %351 = vmatprep.mubr.f32.mxu0 0.0
    %352 = vmatmul.mubr.f32.gmra.mrb[0].mxu0 %v270
    %v353 = vpop.f32.mrb[0].mxu0
    %v354 = vadd.f32 0.0, %v353
    %v355 = vpop.f32.mrb[0].mxu0
    %356 = vdwg.mxu0
    %v357 = vld [vmem:[#allocation2 + $0x118] sm:$0x3]
    %v359 = vsel %vm259, %v357, 0
    %361 = vmatprep.subr.mxu0 0.0
    %362 = vmatpush1.msra.mxu0 %v237
    %363 = vmatprep.subr.mxu0 0.0
    %364 = vmatpush1.msra.mxu0 %v242
    %365 = vmatprep.subr.mxu0 0.0
    %366 = vmatpush1.msra.mxu0 %v247
    %367 = vmatprep.subr.mxu0 0.0
    %368 = vmatpush1.msra.mxu0 %v252
    %369 = vmatprep.subr.mxu0 0.0
    %370 = vmatpush1.msra.mxu0 0.0
    %371 = vmatprep.subr.mxu0 0.0
    %372 = vmatpush1.msra.mxu0 0.0
    %373 = vmatprep.subr.mxu0 0.0
    %374 = vmatpush1.msra.mxu0 0.0
    %375 = vmatprep.subr.mxu0 0.0
    %376 = vmatpush1.msra.mxu0 0.0
    %377 = vmatprep.subr.mxu0 0.0
    %378 = vmatpush1.msra.mxu0 0.0
    %379 = vmatprep.subr.mxu0 0.0
    %380 = vmatpush1.msra.mxu0 0.0
    %381 = vmatprep.subr.mxu0 0.0
    %382 = vmatpush1.msra.mxu0 0.0
    %383 = vmatprep.subr.mxu0 0.0
    %384 = vmatpush1.msra.mxu0 0.0
    %385 = vmatprep.subr.mxu0 0.0
    %386 = vmatpush1.msra.mxu0 0.0
    %387 = vmatprep.subr.mxu0 0.0
    %388 = vmatpush1.msra.mxu0 0.0
    %389 = vmatprep.subr.mxu0 0.0
    %390 = vmatpush1.msra.mxu0 0.0
    %391 = vmatprep.subr.mxu0 0.0
    %392 = vmatpush1.msra.mxu0 0.0
    %393 = vmatprep.subr.mxu0 0.0
    %394 = vmatpush1.msra.mxu0 0.0
    %395 = vmatprep.subr.mxu0 0.0
    %396 = vmatpush1.msra.mxu0 0.0
    %397 = vmatprep.subr.mxu0 0.0
    %398 = vmatpush1.msra.mxu0 0.0
    %399 = vmatprep.subr.mxu0 0.0
    %400 = vmatpush1.msra.mxu0 0.0
    %401 = vmatprep.subr.mxu0 0.0
    %402 = vmatpush1.msra.mxu0 0.0
    %403 = vmatprep.subr.mxu0 0.0
    %404 = vmatpush1.msra.mxu0 0.0
    %405 = vmatprep.subr.mxu0 0.0
    %406 = vmatpush1.msra.mxu0 0.0
    %407 = vmatprep.subr.mxu0 0.0
    %408 = vmatpush1.msra.mxu0 0.0
    %409 = vmatprep.subr.mxu0 0.0
    %410 = vmatpush1.msra.mxu0 0.0
    %411 = vmatprep.subr.mxu0 0.0
    %412 = vmatpush1.msra.mxu0 0.0
    %413 = vmatprep.subr.mxu0 0.0
    %414 = vmatpush1.msra.mxu0 0.0
    %415 = vmatprep.subr.mxu0 0.0
    %416 = vmatpush1.msra.mxu0 0.0
    %417 = vmatprep.subr.mxu0 0.0
    %418 = vmatpush1.msra.mxu0 0.0
    %419 = vmatprep.subr.mxu0 0.0
    %420 = vmatpush1.msra.mxu0 0.0
    %421 = vmatprep.subr.mxu0 0.0
    %422 = vmatpush1.msra.mxu0 0.0
    %423 = vmatprep.subr.mxu0 0.0
    %424 = vmatpush1.msra.mxu0 0.0
    %425 = vmatprep.mubr.f32.mxu0 0.0
    %426 = vmatmul.mubr.f32.gmra.mrb[0].mxu0 %v359
    %v427 = vpop.f32.mrb[0].mxu0
    %v428 = vadd.f32 0.0, %v427
    %v429 = vpop.f32.mrb[0].mxu0
    %430 = vdwg.mxu0
    %v431 = vld [vmem:[#allocation2 + $0x78] sm:$0xff]
    %v432 = vld [vmem:[#allocation2 + $0x80] sm:$0xff]
    %v433 = vld [vmem:[#allocation2 + $0x88] sm:$0xff]
    %v434 = vld [vmem:[#allocation2 + $0x90] sm:$0xff]
    %v435 = vld [vmem:[#allocation2 + $0x98] sm:$0x1]
    %v436 = vlaneseq
    %v437 = vshrl.u32 %v436, 7
    %v438 = vsub.s32 0, %v437
    %v439 = vrot.slane %v435, %v438
    %v441 = vsel %vm259, %v428, 0
    %443 = vmatprep.subr.mxu0 0.0
    %444 = vmatpush1.msra.mxu0 %v431
    %445 = vmatprep.subr.mxu0 0.0
    %446 = vmatpush1.msra.mxu0 %v432
    %447 = vmatprep.subr.mxu0 0.0
    %448 = vmatpush1.msra.mxu0 %v433
    %449 = vmatprep.subr.mxu0 0.0
    %450 = vmatpush1.msra.mxu0 %v434
    %451 = vmatprep.subr.mxu0 0.0
    %452 = vmatpush1.msra.mxu0 0.0
    %453 = vmatprep.subr.mxu0 0.0
    %454 = vmatpush1.msra.mxu0 0.0
    %455 = vmatprep.subr.mxu0 0.0
    %456 = vmatpush1.msra.mxu0 0.0
    %457 = vmatprep.subr.mxu0 0.0
    %458 = vmatpush1.msra.mxu0 0.0
    %459 = vmatprep.subr.mxu0 0.0
    %460 = vmatpush1.msra.mxu0 0.0
    %461 = vmatprep.subr.mxu0 0.0
    %462 = vmatpush1.msra.mxu0 0.0
    %463 = vmatprep.subr.mxu0 0.0
    %464 = vmatpush1.msra.mxu0 0.0
    %465 = vmatprep.subr.mxu0 0.0
    %466 = vmatpush1.msra.mxu0 0.0
    %467 = vmatprep.subr.mxu0 0.0
    %468 = vmatpush1.msra.mxu0 0.0
    %469 = vmatprep.subr.mxu0 0.0
    %470 = vmatpush1.msra.mxu0 0.0
    %471 = vmatprep.subr.mxu0 0.0
    %472 = vmatpush1.msra.mxu0 0.0
    %473 = vmatprep.subr.mxu0 0.0
    %474 = vmatpush1.msra.mxu0 0.0
    %475 = vmatprep.subr.mxu0 0.0
    %476 = vmatpush1.msra.mxu0 0.0
    %477 = vmatprep.subr.mxu0 0.0
    %478 = vmatpush1.msra.mxu0 0.0
    %479 = vmatprep.subr.mxu0 0.0
    %480 = vmatpush1.msra.mxu0 0.0
    %481 = vmatprep.subr.mxu0 0.0
    %482 = vmatpush1.msra.mxu0 0.0
    %483 = vmatprep.subr.mxu0 0.0
    %484 = vmatpush1.msra.mxu0 0.0
    %485 = vmatprep.subr.mxu0 0.0
    %486 = vmatpush1.msra.mxu0 0.0
    %487 = vmatprep.subr.mxu0 0.0
    %488 = vmatpush1.msra.mxu0 0.0
    %489 = vmatprep.subr.mxu0 0.0
    %490 = vmatpush1.msra.mxu0 0.0
    %491 = vmatprep.subr.mxu0 0.0
    %492 = vmatpush1.msra.mxu0 0.0
    %493 = vmatprep.subr.mxu0 0.0
    %494 = vmatpush1.msra.mxu0 0.0
    %495 = vmatprep.subr.mxu0 0.0
    %496 = vmatpush1.msra.mxu0 0.0
    %497 = vmatprep.subr.mxu0 0.0
    %498 = vmatpush1.msra.mxu0 0.0
    %499 = vmatprep.subr.mxu0 0.0
    %500 = vmatpush1.msra.mxu0 0.0
    %501 = vmatprep.subr.mxu0 0.0
    %502 = vmatpush1.msra.mxu0 0.0
    %503 = vmatprep.subr.mxu0 0.0
    %504 = vmatpush1.msra.mxu0 0.0
    %505 = vmatprep.subr.mxu0 0.0
    %506 = vmatpush1.msra.mxu0 0.0
    %507 = vmatprep.mubr.f32.mxu0 0.0
    %508 = vmatmul.mubr.f32.gmra.mrb[0].mxu0 %v441
    %v509 = vpop.f32.mrb[0].mxu0
    %v510 = vadd.f32 %v439, %v509
    %v511 = vpop.f32.mrb[0].mxu0
    %512 = vdwg.mxu0
    %v513 = vld [vmem:[#allocation2 + $0xa0] sm:$0xff]
    %v514 = vld [vmem:[#allocation2 + $0xa8] sm:$0xff]
    %vm515 = vcmask 130048
    %v517 = vsel %vm515, %v510, 0
    %519 = vmatprep.subr.mxu0 0.0
    %520 = vmatpush1.msra.mxu0 %v513
    %521 = vmatprep.subr.mxu0 0.0
    %522 = vmatpush1.msra.mxu0 %v514
    %523 = vmatprep.subr.mxu0 0.0
    %524 = vmatpush1.msra.mxu0 0.0
    %525 = vmatprep.subr.mxu0 0.0
    %526 = vmatpush1.msra.mxu0 0.0
    %527 = vmatprep.subr.mxu0 0.0
    %528 = vmatpush1.msra.mxu0 0.0
    %529 = vmatprep.subr.mxu0 0.0
    %530 = vmatpush1.msra.mxu0 0.0
    %531 = vmatprep.subr.mxu0 0.0
    %532 = vmatpush1.msra.mxu0 0.0
    %533 = vmatprep.subr.mxu0 0.0
    %534 = vmatpush1.msra.mxu0 0.0
    %535 = vmatprep.subr.mxu0 0.0
    %536 = vmatpush1.msra.mxu0 0.0
    %537 = vmatprep.subr.mxu0 0.0
    %538 = vmatpush1.msra.mxu0 0.0
    %539 = vmatprep.subr.mxu0 0.0
    %540 = vmatpush1.msra.mxu0 0.0
    %541 = vmatprep.subr.mxu0 0.0
    %542 = vmatpush1.msra.mxu0 0.0
    %543 = vmatprep.subr.mxu0 0.0
    %544 = vmatpush1.msra.mxu0 0.0
    %545 = vmatprep.subr.mxu0 0.0
    %546 = vmatpush1.msra.mxu0 0.0
    %547 = vmatprep.subr.mxu0 0.0
    %548 = vmatpush1.msra.mxu0 0.0
    %549 = vmatprep.subr.mxu0 0.0
    %550 = vmatpush1.msra.mxu0 0.0
    %551 = vmatprep.subr.mxu0 0.0
    %552 = vmatpush1.msra.mxu0 0.0
    %553 = vmatprep.subr.mxu0 0.0
    %554 = vmatpush1.msra.mxu0 0.0
    %555 = vmatprep.subr.mxu0 0.0
    %556 = vmatpush1.msra.mxu0 0.0
    %557 = vmatprep.subr.mxu0 0.0
    %558 = vmatpush1.msra.mxu0 0.0
    %559 = vmatprep.subr.mxu0 0.0
    %560 = vmatpush1.msra.mxu0 0.0
    %561 = vmatprep.subr.mxu0 0.0
    %562 = vmatpush1.msra.mxu0 0.0
    %563 = vmatprep.subr.mxu0 0.0
    %564 = vmatpush1.msra.mxu0 0.0
    %565 = vmatprep.subr.mxu0 0.0
    %566 = vmatpush1.msra.mxu0 0.0
    %567 = vmatprep.subr.mxu0 0.0
    %568 = vmatpush1.msra.mxu0 0.0
    %569 = vmatprep.subr.mxu0 0.0
    %570 = vmatpush1.msra.mxu0 0.0
    %571 = vmatprep.subr.mxu0 0.0
    %572 = vmatpush1.msra.mxu0 0.0
    %573 = vmatprep.subr.mxu0 0.0
    %574 = vmatpush1.msra.mxu0 0.0
    %575 = vmatprep.subr.mxu0 0.0
    %576 = vmatpush1.msra.mxu0 0.0
    %577 = vmatprep.subr.mxu0 0.0
    %578 = vmatpush1.msra.mxu0 0.0
    %579 = vmatprep.subr.mxu0 0.0
    %580 = vmatpush1.msra.mxu0 0.0
    %581 = vmatprep.subr.mxu0 0.0
    %582 = vmatpush1.msra.mxu0 0.0
    %583 = vmatprep.mubr.f32.mxu0 0.0
    %584 = vmatmul.mubr.f32.gmra.mrb[0].mxu0 %v517
    %v585 = vpop.f32.mrb[0].mxu0
    %v586 = vadd.f32 0.0, %v585
    %v587 = vpop.f32.mrb[0].mxu0
    %588 = vdwg.mxu0
    %v589 = vld [vmem:[#allocation2 + $0x120] sm:$0xff]
    %v590 = vld [vmem:[#allocation2 + $0x128] sm:$0xff]
    %v591 = vld [vmem:[#allocation2 + $0x130] sm:$0xff]
    %v592 = vld [vmem:[#allocation2 + $0x138] sm:$0xff]
    %vm593 = vcmask 15360
    %v595 = vsel %vm593, %v589, 0
    %v598 = vsel %vm593, %v590, 0
    %v601 = vsel %vm593, %v591, 0
    %v604 = vsel %vm593, %v592, 0
    %vm606 = vcmask 1041408
    %v608 = vsel %vm606, %v586, 0
    %610 = vmatprep.subr.mxu0 0.0
    %611 = vmatpush1.msra.mxu0 %v608
    %612 = vmatprep.subr.mxu0 0.0
    %613 = vmatpush1.msra.mxu0 0.0
    %614 = vmatprep.subr.mxu0 0.0
    %615 = vmatpush1.msra.mxu0 0.0
    %616 = vmatprep.subr.mxu0 0.0
    %617 = vmatpush1.msra.mxu0 0.0
    %618 = vmatprep.subr.mxu0 0.0
    %619 = vmatpush1.msra.mxu0 0.0
    %620 = vmatprep.subr.mxu0 0.0
    %621 = vmatpush1.msra.mxu0 0.0
    %622 = vmatprep.subr.mxu0 0.0
    %623 = vmatpush1.msra.mxu0 0.0
    %624 = vmatprep.subr.mxu0 0.0
    %625 = vmatpush1.msra.mxu0 0.0
    %626 = vmatprep.subr.mxu0 0.0
    %627 = vmatpush1.msra.mxu0 0.0
    %628 = vmatprep.subr.mxu0 0.0
    %629 = vmatpush1.msra.mxu0 0.0
    %630 = vmatprep.subr.mxu0 0.0
    %631 = vmatpush1.msra.mxu0 0.0
    %632 = vmatprep.subr.mxu0 0.0
    %633 = vmatpush1.msra.mxu0 0.0
    %634 = vmatprep.subr.mxu0 0.0
    %635 = vmatpush1.msra.mxu0 0.0
    %636 = vmatprep.subr.mxu0 0.0
    %637 = vmatpush1.msra.mxu0 0.0
    %638 = vmatprep.subr.mxu0 0.0
    %639 = vmatpush1.msra.mxu0 0.0
    %640 = vmatprep.subr.mxu0 0.0
    %641 = vmatpush1.msra.mxu0 0.0
    %642 = vmatprep.subr.mxu0 0.0
    %643 = vmatpush1.msra.mxu0 0.0
    %644 = vmatprep.subr.mxu0 0.0
    %645 = vmatpush1.msra.mxu0 0.0
    %646 = vmatprep.subr.mxu0 0.0
    %647 = vmatpush1.msra.mxu0 0.0
    %648 = vmatprep.subr.mxu0 0.0
    %649 = vmatpush1.msra.mxu0 0.0
    %650 = vmatprep.subr.mxu0 0.0
    %651 = vmatpush1.msra.mxu0 0.0
    %652 = vmatprep.subr.mxu0 0.0
    %653 = vmatpush1.msra.mxu0 0.0
    %654 = vmatprep.subr.mxu0 0.0
    %655 = vmatpush1.msra.mxu0 0.0
    %656 = vmatprep.subr.mxu0 0.0
    %657 = vmatpush1.msra.mxu0 0.0
    %658 = vmatprep.subr.mxu0 0.0
    %659 = vmatpush1.msra.mxu0 0.0
    %660 = vmatprep.subr.mxu0 0.0
    %661 = vmatpush1.msra.mxu0 0.0
    %662 = vmatprep.subr.mxu0 0.0
    %663 = vmatpush1.msra.mxu0 0.0
    %664 = vmatprep.subr.mxu0 0.0
    %665 = vmatpush1.msra.mxu0 0.0
    %666 = vmatprep.subr.mxu0 0.0
    %667 = vmatpush1.msra.mxu0 0.0
    %668 = vmatprep.subr.mxu0 0.0
    %669 = vmatpush1.msra.mxu0 0.0
    %670 = vmatprep.subr.mxu0 0.0
    %671 = vmatpush1.msra.mxu0 0.0
    %672 = vmatprep.subr.mxu0 0.0
    %673 = vmatpush1.msra.mxu0 0.0
    %674 = vmatprep.mubr.f32.mxu0 0.0
    %675 = vmatmul.mubr.f32.gmra.mrb[0].mxu0 %v595
    %v676 = vpop.f32.mrb[0].mxu0
    %v677 = vadd.f32 0.0, %v676
    %v678 = vpop.f32.mrb[0].mxu0
    %679 = vmatprep.mubr.f32.mxu0 0.0
    %680 = vmatmul.mubr.f32.gmra.mrb[0].mxu0 %v598
    %v681 = vpop.f32.mrb[0].mxu0
    %v682 = vadd.f32 0.0, %v681
    %v683 = vpop.f32.mrb[0].mxu0
    %684 = vmatprep.mubr.f32.mxu0 0.0
    %685 = vmatmul.mubr.f32.gmra.mrb[0].mxu0 %v601
    %v686 = vpop.f32.mrb[0].mxu0
    %v687 = vadd.f32 0.0, %v686
    %v688 = vpop.f32.mrb[0].mxu0
    %689 = vmatprep.mubr.f32.mxu0 0.0
    %690 = vmatmul.mubr.f32.gmra.mrb[0].mxu0 %v604
    %v691 = vpop.f32.mrb[0].mxu0
    %v692 = vadd.f32 0.0, %v691
    %v693 = vpop.f32.mrb[0].mxu0
    %694 = vdwg.mxu0
    %v695 = vld [vmem:[#allocation2 + $0xf8] sm:$0xff]
    %v696 = vld [vmem:[#allocation2 + $0x100] sm:$0xff]
    %v697 = vld [vmem:[#allocation2 + $0x108] sm:$0xff]
    %v698 = vld [vmem:[#allocation2 + $0x110] sm:$0xff]
    %v699 = vadd.f32 %v695, %v677
    %v700 = vadd.f32 %v696, %v682
    %v701 = vadd.f32 %v697, %v687
    %v702 = vadd.f32 %v698, %v692
    %v703 = vld [vmem:[#allocation2 + $0xb0] sm:$0xff]
    %v704 = vld [vmem:[#allocation2 + $0xb8] sm:$0xff]
    %v705 = vld [vmem:[#allocation2 + $0xc0] sm:$0xff]
    %v706 = vld [vmem:[#allocation2 + $0xc8] sm:$0xff]
    %v708 = vsel %vm259, %v699, 0
    %v711 = vsel %vm259, %v700, 0
    %v714 = vsel %vm259, %v701, 0
    %v717 = vsel %vm259, %v702, 0
    %719 = vmatprep.subr.mxu0 0.0
    %720 = vmatpush1.msra.mxu0 %v703
    %721 = vmatprep.subr.mxu0 0.0
    %722 = vmatpush1.msra.mxu0 %v704
    %723 = vmatprep.subr.mxu0 0.0
    %724 = vmatpush1.msra.mxu0 %v705
    %725 = vmatprep.subr.mxu0 0.0
    %726 = vmatpush1.msra.mxu0 %v706
    %727 = vmatprep.subr.mxu0 0.0
    %728 = vmatpush1.msra.mxu0 0.0
    %729 = vmatprep.subr.mxu0 0.0
    %730 = vmatpush1.msra.mxu0 0.0
    %731 = vmatprep.subr.mxu0 0.0
    %732 = vmatpush1.msra.mxu0 0.0
    %733 = vmatprep.subr.mxu0 0.0
    %734 = vmatpush1.msra.mxu0 0.0
    %735 = vmatprep.subr.mxu0 0.0
    %736 = vmatpush1.msra.mxu0 0.0
    %737 = vmatprep.subr.mxu0 0.0
    %738 = vmatpush1.msra.mxu0 0.0
    %739 = vmatprep.subr.mxu0 0.0
    %740 = vmatpush1.msra.mxu0 0.0
    %741 = vmatprep.subr.mxu0 0.0
    %742 = vmatpush1.msra.mxu0 0.0
    %743 = vmatprep.subr.mxu0 0.0
    %744 = vmatpush1.msra.mxu0 0.0
    %745 = vmatprep.subr.mxu0 0.0
    %746 = vmatpush1.msra.mxu0 0.0
    %747 = vmatprep.subr.mxu0 0.0
    %748 = vmatpush1.msra.mxu0 0.0
    %749 = vmatprep.subr.mxu0 0.0
    %750 = vmatpush1.msra.mxu0 0.0
    %751 = vmatprep.subr.mxu0 0.0
    %752 = vmatpush1.msra.mxu0 0.0
    %753 = vmatprep.subr.mxu0 0.0
    %754 = vmatpush1.msra.mxu0 0.0
    %755 = vmatprep.subr.mxu0 0.0
    %756 = vmatpush1.msra.mxu0 0.0
    %757 = vmatprep.subr.mxu0 0.0
    %758 = vmatpush1.msra.mxu0 0.0
    %759 = vmatprep.subr.mxu0 0.0
    %760 = vmatpush1.msra.mxu0 0.0
    %761 = vmatprep.subr.mxu0 0.0
    %762 = vmatpush1.msra.mxu0 0.0
    %763 = vmatprep.subr.mxu0 0.0
    %764 = vmatpush1.msra.mxu0 0.0
    %765 = vmatprep.subr.mxu0 0.0
    %766 = vmatpush1.msra.mxu0 0.0
    %767 = vmatprep.subr.mxu0 0.0
    %768 = vmatpush1.msra.mxu0 0.0
    %769 = vmatprep.subr.mxu0 0.0
    %770 = vmatpush1.msra.mxu0 0.0
    %771 = vmatprep.subr.mxu0 0.0
    %772 = vmatpush1.msra.mxu0 0.0
    %773 = vmatprep.subr.mxu0 0.0
    %774 = vmatpush1.msra.mxu0 0.0
    %775 = vmatprep.subr.mxu0 0.0
    %776 = vmatpush1.msra.mxu0 0.0
    %777 = vmatprep.subr.mxu0 0.0
    %778 = vmatpush1.msra.mxu0 0.0
    %779 = vmatprep.subr.mxu0 0.0
    %780 = vmatpush1.msra.mxu0 0.0
    %781 = vmatprep.subr.mxu0 0.0
    %782 = vmatpush1.msra.mxu0 0.0
    %783 = vmatprep.mubr.f32.mxu0 0.0
    %784 = vmatmul.mubr.f32.gmra.mrb[0].mxu0 %v708
    %v785 = vpop.f32.mrb[0].mxu0
    %v786 = vadd.f32 0.0, %v785
    %v787 = vpop.f32.mrb[0].mxu0
    %788 = vmatprep.mubr.f32.mxu0 0.0
    %789 = vmatmul.mubr.f32.gmra.mrb[0].mxu0 %v711
    %v790 = vpop.f32.mrb[0].mxu0
    %v791 = vadd.f32 0.0, %v790
    %v792 = vpop.f32.mrb[0].mxu0
    %793 = vmatprep.mubr.f32.mxu0 0.0
    %794 = vmatmul.mubr.f32.gmra.mrb[0].mxu0 %v714
    %v795 = vpop.f32.mrb[0].mxu0
    %v796 = vadd.f32 0.0, %v795
    %v797 = vpop.f32.mrb[0].mxu0
    %798 = vmatprep.mubr.f32.mxu0 0.0
    %799 = vmatmul.mubr.f32.gmra.mrb[0].mxu0 %v717
    %v800 = vpop.f32.mrb[0].mxu0
    %v801 = vadd.f32 0.0, %v800
    %v802 = vpop.f32.mrb[0].mxu0
    %803 = vdwg.mxu0
    %v804 = vmul.f32 %v786, 0.35355338
    %v805 = vmul.f32 %v791, 0.35355338
    %v806 = vmul.f32 %v796, 0.35355338
    %v807 = vmul.f32 %v801, 0.35355338
    %v808 = vld [vmem:[#allocation2 + $0x140] sm:$0xff]
    %v809 = vld [vmem:[#allocation2 + $0x148] sm:$0xff]
    %v810 = vld [vmem:[#allocation2 + $0x150] sm:$0xff]
    %v811 = vld [vmem:[#allocation2 + $0x158] sm:$0xff]
    %vm812 = vcmask 64512
    %v814 = vsel %vm812, %v804, 0
    %v817 = vsel %vm812, %v805, 0
    %v820 = vsel %vm812, %v806, 0
    %v823 = vsel %vm812, %v807, 0
    %v826 = vsel %vm812, %v339, 0
    %v829 = vsel %vm812, %v344, 0
    %v832 = vsel %vm812, %v349, 0
    %v835 = vsel %vm812, %v354, 0
    %837 = vmatprep.subr.mxu0 0.0
    %838 = vmatpush1.xpose.msra.mxu0 %v826
    %839 = vmatprep.subr.mxu0 0.0
    %840 = vmatpush1.xpose.msra.mxu0 %v829
    %841 = vmatprep.subr.mxu0 0.0
    %842 = vmatpush1.xpose.msra.mxu0 %v832
    %843 = vmatprep.subr.mxu0 0.0
    %844 = vmatpush1.xpose.msra.mxu0 %v835
    %845 = vmatprep.subr.mxu0 0.0
    %846 = vmatpush1.xpose.msra.mxu0 0.0
    %847 = vmatprep.subr.mxu0 0.0
    %848 = vmatpush1.xpose.msra.mxu0 0.0
    %849 = vmatprep.subr.mxu0 0.0
    %850 = vmatpush1.xpose.msra.mxu0 0.0
    %851 = vmatprep.subr.mxu0 0.0
    %852 = vmatpush1.xpose.msra.mxu0 0.0
    %853 = vmatprep.subr.mxu0 0.0
    %854 = vmatpush1.xpose.msra.mxu0 0.0
    %855 = vmatprep.subr.mxu0 0.0
    %856 = vmatpush1.xpose.msra.mxu0 0.0
    %857 = vmatprep.subr.mxu0 0.0
    %858 = vmatpush1.xpose.msra.mxu0 0.0
    %859 = vmatprep.subr.mxu0 0.0
    %860 = vmatpush1.xpose.msra.mxu0 0.0
    %861 = vmatprep.subr.mxu0 0.0
    %862 = vmatpush1.xpose.msra.mxu0 0.0
    %863 = vmatprep.subr.mxu0 0.0
    %864 = vmatpush1.xpose.msra.mxu0 0.0
    %865 = vmatprep.subr.mxu0 0.0
    %866 = vmatpush1.xpose.msra.mxu0 0.0
    %867 = vmatprep.subr.mxu0 0.0
    %868 = vmatpush1.xpose.msra.mxu0 0.0
    %869 = vmatprep.subr.mxu0 0.0
    %870 = vmatpush1.xpose.msra.mxu0 0.0
    %871 = vmatprep.subr.mxu0 0.0
    %872 = vmatpush1.xpose.msra.mxu0 0.0
    %873 = vmatprep.subr.mxu0 0.0
    %874 = vmatpush1.xpose.msra.mxu0 0.0
    %875 = vmatprep.subr.mxu0 0.0
    %876 = vmatpush1.xpose.msra.mxu0 0.0
    %877 = vmatprep.subr.mxu0 0.0
    %878 = vmatpush1.xpose.msra.mxu0 0.0
    %879 = vmatprep.subr.mxu0 0.0
    %880 = vmatpush1.xpose.msra.mxu0 0.0
    %881 = vmatprep.subr.mxu0 0.0
    %882 = vmatpush1.xpose.msra.mxu0 0.0
    %883 = vmatprep.subr.mxu0 0.0
    %884 = vmatpush1.xpose.msra.mxu0 0.0
    %885 = vmatprep.subr.mxu0 0.0
    %886 = vmatpush1.xpose.msra.mxu0 0.0
    %887 = vmatprep.subr.mxu0 0.0
    %888 = vmatpush1.xpose.msra.mxu0 0.0
    %889 = vmatprep.subr.mxu0 0.0
    %890 = vmatpush1.xpose.msra.mxu0 0.0
    %891 = vmatprep.subr.mxu0 0.0
    %892 = vmatpush1.xpose.msra.mxu0 0.0
    %893 = vmatprep.subr.mxu0 0.0
    %894 = vmatpush1.xpose.msra.mxu0 0.0
    %895 = vmatprep.subr.mxu0 0.0
    %896 = vmatpush1.xpose.msra.mxu0 0.0
    %897 = vmatprep.subr.mxu0 0.0
    %898 = vmatpush1.xpose.msra.mxu0 0.0
    %899 = vmatprep.subr.mxu0 0.0
    %900 = vmatpush1.xpose.msra.mxu0 0.0
    %901 = vmatprep.mubr.f32.mxu0 0.0
    %902 = vmatmul.mubr.f32.gmra.mrb[0].mxu0 %v814
    %v903 = vpop.f32.mrb[0].mxu0
    %v904 = vadd.f32 %v808, %v903
    %v905 = vpop.f32.mrb[0].mxu0
    %906 = vmatprep.mubr.f32.mxu0 0.0
    %907 = vmatmul.mubr.f32.gmra.mrb[0].mxu0 %v817
    %v908 = vpop.f32.mrb[0].mxu0
    %v909 = vadd.f32 %v809, %v908
    %v910 = vpop.f32.mrb[0].mxu0
    %911 = vmatprep.mubr.f32.mxu0 0.0
    %912 = vmatmul.mubr.f32.gmra.mrb[0].mxu0 %v820
    %v913 = vpop.f32.mrb[0].mxu0
    %v914 = vadd.f32 %v810, %v913
    %v915 = vpop.f32.mrb[0].mxu0
    %916 = vmatprep.mubr.f32.mxu0 0.0
    %917 = vmatmul.mubr.f32.gmra.mrb[0].mxu0 %v823
    %v918 = vpop.f32.mrb[0].mxu0
    %v919 = vadd.f32 %v811, %v918
    %v920 = vpop.f32.mrb[0].mxu0
    %921 = vdwg.mxu0
    %v922 = vsel %vm259, %v904, -inf
    %923 = vmax.xlane.f32.xlu0 %v922
    %v924 = vpop.xlane.xlu0 %923
    %v925 = vsel %vm259, %v909, -inf
    %926 = vmax.xlane.f32.xlu0 %v925
    %v927 = vpop.xlane.xlu0 %926
    %v928 = vsel %vm259, %v914, -inf
    %929 = vmax.xlane.f32.xlu0 %v928
    %v930 = vpop.xlane.xlu0 %929
    %v931 = vsel %vm259, %v919, -inf
    %932 = vmax.xlane.f32.xlu0 %v931
    %v933 = vpop.xlane.xlu0 %932
    %v934 = vsub.f32 %v904, %v924
    %v935 = vsub.f32 %v909, %v927
    %v936 = vsub.f32 %v914, %v930
    %v937 = vsub.f32 %v919, %v933
    %v938 = vmul.f32 %v934, 1.442695
    %v939 = vpow.pop %v938
    %v940 = vmul.f32 %v935, 1.442695
    %v941 = vpow.pop %v940
    %v942 = vmul.f32 %v936, 1.442695
    %v943 = vpow.pop %v942
    %v944 = vmul.f32 %v937, 1.442695
    %v945 = vpow.pop %v944
    %v946 = vsel %vm259, %v939, 0.0
    %947 = vadd.xlane.f32.xlu0 %v946
    %v948 = vpop.xlane.xlu0 %947
    %v949 = vsel %vm259, %v941, 0.0
    %950 = vadd.xlane.f32.xlu0 %v949
    %v951 = vpop.xlane.xlu0 %950
    %v952 = vsel %vm259, %v943, 0.0
    %953 = vadd.xlane.f32.xlu0 %v952
    %v954 = vpop.xlane.xlu0 %953
    %v955 = vsel %vm259, %v945, 0.0
    %956 = vadd.xlane.f32.xlu0 %v955
    %v957 = vpop.xlane.xlu0 %956
    %v958 = vrcp.pop %v948
    %v959 = vmul.f32 %v939, %v958
    %v960 = vrcp.pop %v951
    %v961 = vmul.f32 %v941, %v960
    %v962 = vrcp.pop %v954
    %v963 = vmul.f32 %v943, %v962
    %v964 = vrcp.pop %v957
    %v965 = vmul.f32 %v945, %v964
    %966 = vrot.lane.b32.xlu0 %v339, 96
    %v967 = vpop.permute.xlu0 %966
    %968 = vrot.lane.b32.xlu0 %v344, 96
    %v969 = vpop.permute.xlu0 %968
    %970 = vrot.lane.b32.xlu0 %v349, 96
    %v971 = vpop.permute.xlu0 %970
    %972 = vrot.lane.b32.xlu0 %v354, 96
    %v973 = vpop.permute.xlu0 %972
    %v979 = vsel %vm259, %v959, 0
    %v982 = vsel %vm259, %v961, 0
    %v985 = vsel %vm259, %v963, 0
    %v988 = vsel %vm259, %v965, 0
    %990 = vmatprep.subr.mxu0 0.0
    %991 = vmatpush1.msra.mxu0 %v967
    %992 = vmatprep.subr.mxu0 0.0
    %993 = vmatpush1.msra.mxu0 %v969
    %994 = vmatprep.subr.mxu0 0.0
    %995 = vmatpush1.msra.mxu0 %v971
    %996 = vmatprep.subr.mxu0 0.0
    %997 = vmatpush1.msra.mxu0 %v973
    %998 = vmatprep.subr.mxu0 0.0
    %999 = vmatpush1.msra.mxu0 0.0
    %1000 = vmatprep.subr.mxu0 0.0
    %1001 = vmatpush1.msra.mxu0 0.0
    %1002 = vmatprep.subr.mxu0 0.0
    %1003 = vmatpush1.msra.mxu0 0.0
    %1004 = vmatprep.subr.mxu0 0.0
    %1005 = vmatpush1.msra.mxu0 0.0
    %1006 = vmatprep.subr.mxu0 0.0
    %1007 = vmatpush1.msra.mxu0 0.0
    %1008 = vmatprep.subr.mxu0 0.0
    %1009 = vmatpush1.msra.mxu0 0.0
    %1010 = vmatprep.subr.mxu0 0.0
    %1011 = vmatpush1.msra.mxu0 0.0
    %1012 = vmatprep.subr.mxu0 0.0
    %1013 = vmatpush1.msra.mxu0 0.0
    %1014 = vmatprep.subr.mxu0 0.0
    %1015 = vmatpush1.msra.mxu0 0.0
    %1016 = vmatprep.subr.mxu0 0.0
    %1017 = vmatpush1.msra.mxu0 0.0
    %1018 = vmatprep.subr.mxu0 0.0
    %1019 = vmatpush1.msra.mxu0 0.0
    %1020 = vmatprep.subr.mxu0 0.0
    %1021 = vmatpush1.msra.mxu0 0.0
    %1022 = vmatprep.subr.mxu0 0.0
    %1023 = vmatpush1.msra.mxu0 0.0
    %1024 = vmatprep.subr.mxu0 0.0
    %1025 = vmatpush1.msra.mxu0 0.0
    %1026 = vmatprep.subr.mxu0 0.0
    %1027 = vmatpush1.msra.mxu0 0.0
    %1028 = vmatprep.subr.mxu0 0.0
    %1029 = vmatpush1.msra.mxu0 0.0
    %1030 = vmatprep.subr.mxu0 0.0
    %1031 = vmatpush1.msra.mxu0 0.0
    %1032 = vmatprep.subr.mxu0 0.0
    %1033 = vmatpush1.msra.mxu0 0.0
    %1034 = vmatprep.subr.mxu0 0.0
    %1035 = vmatpush1.msra.mxu0 0.0
    %1036 = vmatprep.subr.mxu0 0.0
    %1037 = vmatpush1.msra.mxu0 0.0
    %1038 = vmatprep.subr.mxu0 0.0
    %1039 = vmatpush1.msra.mxu0 0.0
    %1040 = vmatprep.subr.mxu0 0.0
    %1041 = vmatpush1.msra.mxu0 0.0
    %1042 = vmatprep.subr.mxu0 0.0
    %1043 = vmatpush1.msra.mxu0 0.0
    %1044 = vmatprep.subr.mxu0 0.0
    %1045 = vmatpush1.msra.mxu0 0.0
    %1046 = vmatprep.subr.mxu0 0.0
    %1047 = vmatpush1.msra.mxu0 0.0
    %1048 = vmatprep.subr.mxu0 0.0
    %1049 = vmatpush1.msra.mxu0 0.0
    %1050 = vmatprep.subr.mxu0 0.0
    %1051 = vmatpush1.msra.mxu0 0.0
    %1052 = vmatprep.subr.mxu0 0.0
    %1053 = vmatpush1.msra.mxu0 0.0
    %1054 = vmatprep.mubr.f32.mxu0 0.0
    %1055 = vmatmul.mubr.f32.gmra.mrb[0].mxu0 %v979
    %v1056 = vpop.f32.mrb[0].mxu0
    %v1057 = vadd.f32 0.0, %v1056
    %v1058 = vpop.f32.mrb[0].mxu0
    %1059 = vmatprep.mubr.f32.mxu0 0.0
    %1060 = vmatmul.mubr.f32.gmra.mrb[0].mxu0 %v982
    %v1061 = vpop.f32.mrb[0].mxu0
    %v1062 = vadd.f32 0.0, %v1061
    %v1063 = vpop.f32.mrb[0].mxu0
    %1064 = vmatprep.mubr.f32.mxu0 0.0
    %1065 = vmatmul.mubr.f32.gmra.mrb[0].mxu0 %v985
    %v1066 = vpop.f32.mrb[0].mxu0
    %v1067 = vadd.f32 0.0, %v1066
    %v1068 = vpop.f32.mrb[0].mxu0
    %1069 = vmatprep.mubr.f32.mxu0 0.0
    %1070 = vmatmul.mubr.f32.gmra.mrb[0].mxu0 %v988
    %v1071 = vpop.f32.mrb[0].mxu0
    %v1072 = vadd.f32 0.0, %v1071
    %v1073 = vpop.f32.mrb[0].mxu0
    %1074 = vdwg.mxu0
    %1075 = vrot.lane.b32.xlu0 %v804, 120
    %v1076 = vpop.permute.xlu0 %1075
    %1077 = vrot.lane.b32.xlu0 %v805, 120
    %v1078 = vpop.permute.xlu0 %1077
    %1079 = vrot.lane.b32.xlu0 %v806, 120
    %v1080 = vpop.permute.xlu0 %1079
    %1081 = vrot.lane.b32.xlu0 %v807, 120
    %v1082 = vpop.permute.xlu0 %1081
    %1083 = vrot.lane.b32.xlu0 %v339, 120
    %v1084 = vpop.permute.xlu0 %1083
    %1085 = vrot.lane.b32.xlu0 %v344, 120
    %v1086 = vpop.permute.xlu0 %1085
    %1087 = vrot.lane.b32.xlu0 %v349, 120
    %v1088 = vpop.permute.xlu0 %1087
    %1089 = vrot.lane.b32.xlu0 %v354, 120
    %v1090 = vpop.permute.xlu0 %1089
    %v1091 = vsel %vm812, %v1076, 0
    %v1093 = vsel %vm812, %v1078, 0
    %v1095 = vsel %vm812, %v1080, 0
    %v1097 = vsel %vm812, %v1082, 0
    %v1099 = vsel %vm812, %v1084, 0
    %v1101 = vsel %vm812, %v1086, 0
    %v1103 = vsel %vm812, %v1088, 0
    %v1105 = vsel %vm812, %v1090, 0
    %1107 = vmatprep.subr.mxu0 0.0
    %1108 = vmatpush1.xpose.msra.mxu0 %v1099
    %1109 = vmatprep.subr.mxu0 0.0
    %1110 = vmatpush1.xpose.msra.mxu0 %v1101
    %1111 = vmatprep.subr.mxu0 0.0
    %1112 = vmatpush1.xpose.msra.mxu0 %v1103
    %1113 = vmatprep.subr.mxu0 0.0
    %1114 = vmatpush1.xpose.msra.mxu0 %v1105
    %1115 = vmatprep.subr.mxu0 0.0
    %1116 = vmatpush1.xpose.msra.mxu0 0.0
    %1117 = vmatprep.subr.mxu0 0.0
    %1118 = vmatpush1.xpose.msra.mxu0 0.0
    %1119 = vmatprep.subr.mxu0 0.0
    %1120 = vmatpush1.xpose.msra.mxu0 0.0
    %1121 = vmatprep.subr.mxu0 0.0
    %1122 = vmatpush1.xpose.msra.mxu0 0.0
    %1123 = vmatprep.subr.mxu0 0.0
    %1124 = vmatpush1.xpose.msra.mxu0 0.0
    %1125 = vmatprep.subr.mxu0 0.0
    %1126 = vmatpush1.xpose.msra.mxu0 0.0
    %1127 = vmatprep.subr.mxu0 0.0
    %1128 = vmatpush1.xpose.msra.mxu0 0.0
    %1129 = vmatprep.subr.mxu0 0.0
    %1130 = vmatpush1.xpose.msra.mxu0 0.0
    %1131 = vmatprep.subr.mxu0 0.0
    %1132 = vmatpush1.xpose.msra.mxu0 0.0
    %1133 = vmatprep.subr.mxu0 0.0
    %1134 = vmatpush1.xpose.msra.mxu0 0.0
    %1135 = vmatprep.subr.mxu0 0.0
    %1136 = vmatpush1.xpose.msra.mxu0 0.0
    %1137 = vmatprep.subr.mxu0 0.0
    %1138 = vmatpush1.xpose.msra.mxu0 0.0
    %1139 = vmatprep.subr.mxu0 0.0
    %1140 = vmatpush1.xpose.msra.mxu0 0.0
    %1141 = vmatprep.subr.mxu0 0.0
    %1142 = vmatpush1.xpose.msra.mxu0 0.0
    %1143 = vmatprep.subr.mxu0 0.0
    %1144 = vmatpush1.xpose.msra.mxu0 0.0
    %1145 = vmatprep.subr.mxu0 0.0
    %1146 = vmatpush1.xpose.msra.mxu0 0.0
    %1147 = vmatprep.subr.mxu0 0.0
    %1148 = vmatpush1.xpose.msra.mxu0 0.0
    %1149 = vmatprep.subr.mxu0 0.0
    %1150 = vmatpush1.xpose.msra.mxu0 0.0
    %1151 = vmatprep.subr.mxu0 0.0
    %1152 = vmatpush1.xpose.msra.mxu0 0.0
    %1153 = vmatprep.subr.mxu0 0.0
    %1154 = vmatpush1.xpose.msra.mxu0 0.0
    %1155 = vmatprep.subr.mxu0 0.0
    %1156 = vmatpush1.xpose.msra.mxu0 0.0
    %1157 = vmatprep.subr.mxu0 0.0
    %1158 = vmatpush1.xpose.msra.mxu0 0.0
    %1159 = vmatprep.subr.mxu0 0.0
    %1160 = vmatpush1.xpose.msra.mxu0 0.0
    %1161 = vmatprep.subr.mxu0 0.0
    %1162 = vmatpush1.xpose.msra.mxu0 0.0
    %1163 = vmatprep.subr.mxu0 0.0
    %1164 = vmatpush1.xpose.msra.mxu0 0.0
    %1165 = vmatprep.subr.mxu0 0.0
    %1166 = vmatpush1.xpose.msra.mxu0 0.0
    %1167 = vmatprep.subr.mxu0 0.0
    %1168 = vmatpush1.xpose.msra.mxu0 0.0
    %1169 = vmatprep.subr.mxu0 0.0
    %1170 = vmatpush1.xpose.msra.mxu0 0.0
    %1171 = vmatprep.mubr.f32.mxu0 0.0
    %1172 = vmatmul.mubr.f32.gmra.mrb[0].mxu0 %v1091
    %v1173 = vpop.f32.mrb[0].mxu0
    %v1174 = vadd.f32 %v808, %v1173
    %v1175 = vpop.f32.mrb[0].mxu0
    %1176 = vmatprep.mubr.f32.mxu0 0.0
    %1177 = vmatmul.mubr.f32.gmra.mrb[0].mxu0 %v1093
    %v1178 = vpop.f32.mrb[0].mxu0
    %v1179 = vadd.f32 %v809, %v1178
    %v1180 = vpop.f32.mrb[0].mxu0
    %1181 = vmatprep.mubr.f32.mxu0 0.0
    %1182 = vmatmul.mubr.f32.gmra.mrb[0].mxu0 %v1095
    %v1183 = vpop.f32.mrb[0].mxu0
    %v1184 = vadd.f32 %v810, %v1183
    %v1185 = vpop.f32.mrb[0].mxu0
    %1186 = vmatprep.mubr.f32.mxu0 0.0
    %1187 = vmatmul.mubr.f32.gmra.mrb[0].mxu0 %v1097
    %v1188 = vpop.f32.mrb[0].mxu0
    %v1189 = vadd.f32 %v811, %v1188
    %v1190 = vpop.f32.mrb[0].mxu0
    %1191 = vdwg.mxu0
    %v1192 = vsel %vm259, %v1174, -inf
    %1193 = vmax.xlane.f32.xlu0 %v1192
    %v1194 = vpop.xlane.xlu0 %1193
    %v1195 = vsel %vm259, %v1179, -inf
    %1196 = vmax.xlane.f32.xlu0 %v1195
    %v1197 = vpop.xlane.xlu0 %1196
    %v1198 = vsel %vm259, %v1184, -inf
    %1199 = vmax.xlane.f32.xlu0 %v1198
    %v1200 = vpop.xlane.xlu0 %1199
    %v1201 = vsel %vm259, %v1189, -inf
    %1202 = vmax.xlane.f32.xlu0 %v1201
    %v1203 = vpop.xlane.xlu0 %1202
    %v1204 = vsub.f32 %v1174, %v1194
    %v1205 = vsub.f32 %v1179, %v1197
    %v1206 = vsub.f32 %v1184, %v1200
    %v1207 = vsub.f32 %v1189, %v1203
    %v1208 = vmul.f32 %v1204, 1.442695
    %v1209 = vpow.pop %v1208
    %v1210 = vmul.f32 %v1205, 1.442695
    %v1211 = vpow.pop %v1210
    %v1212 = vmul.f32 %v1206, 1.442695
    %v1213 = vpow.pop %v1212
    %v1214 = vmul.f32 %v1207, 1.442695
    %v1215 = vpow.pop %v1214
    %v1216 = vsel %vm259, %v1209, 0.0
    %1217 = vadd.xlane.f32.xlu0 %v1216
    %v1218 = vpop.xlane.xlu0 %1217
    %v1219 = vsel %vm259, %v1211, 0.0
    %1220 = vadd.xlane.f32.xlu0 %v1219
    %v1221 = vpop.xlane.xlu0 %1220
    %v1222 = vsel %vm259, %v1213, 0.0
    %1223 = vadd.xlane.f32.xlu0 %v1222
    %v1224 = vpop.xlane.xlu0 %1223
    %v1225 = vsel %vm259, %v1215, 0.0
    %1226 = vadd.xlane.f32.xlu0 %v1225
    %v1227 = vpop.xlane.xlu0 %1226
    %v1228 = vrcp.pop %v1218
    %v1229 = vmul.f32 %v1209, %v1228
    %v1230 = vrcp.pop %v1221
    %v1231 = vmul.f32 %v1211, %v1230
    %v1232 = vrcp.pop %v1224
    %v1233 = vmul.f32 %v1213, %v1232
    %v1234 = vrcp.pop %v1227
    %v1235 = vmul.f32 %v1215, %v1234
    %1236 = vrot.lane.b32.xlu0 %v339, 88
    %v1237 = vpop.permute.xlu0 %1236
    %1238 = vrot.lane.b32.xlu0 %v344, 88
    %v1239 = vpop.permute.xlu0 %1238
    %1240 = vrot.lane.b32.xlu0 %v349, 88
    %v1241 = vpop.permute.xlu0 %1240
    %1242 = vrot.lane.b32.xlu0 %v354, 88
    %v1243 = vpop.permute.xlu0 %1242
    %v1249 = vsel %vm259, %v1229, 0
    %v1252 = vsel %vm259, %v1231, 0
    %v1255 = vsel %vm259, %v1233, 0
    %v1258 = vsel %vm259, %v1235, 0
    %1260 = vmatprep.subr.mxu0 0.0
    %1261 = vmatpush1.msra.mxu0 %v1237
    %1262 = vmatprep.subr.mxu0 0.0
    %1263 = vmatpush1.msra.mxu0 %v1239
    %1264 = vmatprep.subr.mxu0 0.0
    %1265 = vmatpush1.msra.mxu0 %v1241
    %1266 = vmatprep.subr.mxu0 0.0
    %1267 = vmatpush1.msra.mxu0 %v1243
    %1268 = vmatprep.subr.mxu0 0.0
    %1269 = vmatpush1.msra.mxu0 0.0
    %1270 = vmatprep.subr.mxu0 0.0
    %1271 = vmatpush1.msra.mxu0 0.0
    %1272 = vmatprep.subr.mxu0 0.0
    %1273 = vmatpush1.msra.mxu0 0.0
    %1274 = vmatprep.subr.mxu0 0.0
    %1275 = vmatpush1.msra.mxu0 0.0
    %1276 = vmatprep.subr.mxu0 0.0
    %1277 = vmatpush1.msra.mxu0 0.0
    %1278 = vmatprep.subr.mxu0 0.0
    %1279 = vmatpush1.msra.mxu0 0.0
    %1280 = vmatprep.subr.mxu0 0.0
    %1281 = vmatpush1.msra.mxu0 0.0
    %1282 = vmatprep.subr.mxu0 0.0
    %1283 = vmatpush1.msra.mxu0 0.0
    %1284 = vmatprep.subr.mxu0 0.0
    %1285 = vmatpush1.msra.mxu0 0.0
    %1286 = vmatprep.subr.mxu0 0.0
    %1287 = vmatpush1.msra.mxu0 0.0
    %1288 = vmatprep.subr.mxu0 0.0
    %1289 = vmatpush1.msra.mxu0 0.0
    %1290 = vmatprep.subr.mxu0 0.0
    %1291 = vmatpush1.msra.mxu0 0.0
    %1292 = vmatprep.subr.mxu0 0.0
    %1293 = vmatpush1.msra.mxu0 0.0
    %1294 = vmatprep.subr.mxu0 0.0
    %1295 = vmatpush1.msra.mxu0 0.0
    %1296 = vmatprep.subr.mxu0 0.0
    %1297 = vmatpush1.msra.mxu0 0.0
    %1298 = vmatprep.subr.mxu0 0.0
    %1299 = vmatpush1.msra.mxu0 0.0
    %1300 = vmatprep.subr.mxu0 0.0
    %1301 = vmatpush1.msra.mxu0 0.0
    %1302 = vmatprep.subr.mxu0 0.0
    %1303 = vmatpush1.msra.mxu0 0.0
    %1304 = vmatprep.subr.mxu0 0.0
    %1305 = vmatpush1.msra.mxu0 0.0
    %1306 = vmatprep.subr.mxu0 0.0
    %1307 = vmatpush1.msra.mxu0 0.0
    %1308 = vmatprep.subr.mxu0 0.0
    %1309 = vmatpush1.msra.mxu0 0.0
    %1310 = vmatprep.subr.mxu0 0.0
    %1311 = vmatpush1.msra.mxu0 0.0
    %1312 = vmatprep.subr.mxu0 0.0
    %1313 = vmatpush1.msra.mxu0 0.0
    %1314 = vmatprep.subr.mxu0 0.0
    %1315 = vmatpush1.msra.mxu0 0.0
    %1316 = vmatprep.subr.mxu0 0.0
    %1317 = vmatpush1.msra.mxu0 0.0
    %1318 = vmatprep.subr.mxu0 0.0
    %1319 = vmatpush1.msra.mxu0 0.0
    %1320 = vmatprep.subr.mxu0 0.0
    %1321 = vmatpush1.msra.mxu0 0.0
    %1322 = vmatprep.subr.mxu0 0.0
    %1323 = vmatpush1.msra.mxu0 0.0
    %1324 = vmatprep.mubr.f32.mxu0 0.0
    %1325 = vmatmul.mubr.f32.gmra.mrb[0].mxu0 %v1249
    %v1326 = vpop.f32.mrb[0].mxu0
    %v1327 = vadd.f32 0.0, %v1326
    %v1328 = vpop.f32.mrb[0].mxu0
    %1329 = vmatprep.mubr.f32.mxu0 0.0
    %1330 = vmatmul.mubr.f32.gmra.mrb[0].mxu0 %v1252
    %v1331 = vpop.f32.mrb[0].mxu0
    %v1332 = vadd.f32 0.0, %v1331
    %v1333 = vpop.f32.mrb[0].mxu0
    %1334 = vmatprep.mubr.f32.mxu0 0.0
    %1335 = vmatmul.mubr.f32.gmra.mrb[0].mxu0 %v1255
    %v1336 = vpop.f32.mrb[0].mxu0
    %v1337 = vadd.f32 0.0, %v1336
    %v1338 = vpop.f32.mrb[0].mxu0
    %1339 = vmatprep.mubr.f32.mxu0 0.0
    %1340 = vmatmul.mubr.f32.gmra.mrb[0].mxu0 %v1258
    %v1341 = vpop.f32.mrb[0].mxu0
    %v1342 = vadd.f32 0.0, %v1341
    %v1343 = vpop.f32.mrb[0].mxu0
    %1344 = vdwg.mxu0
    %1345 = vrot.lane.b32.xlu0 %v804, 112
    %v1346 = vpop.permute.xlu0 %1345
    %1347 = vrot.lane.b32.xlu0 %v805, 112
    %v1348 = vpop.permute.xlu0 %1347
    %1349 = vrot.lane.b32.xlu0 %v806, 112
    %v1350 = vpop.permute.xlu0 %1349
    %1351 = vrot.lane.b32.xlu0 %v807, 112
    %v1352 = vpop.permute.xlu0 %1351
    %1353 = vrot.lane.b32.xlu0 %v339, 112
    %v1354 = vpop.permute.xlu0 %1353
    %1355 = vrot.lane.b32.xlu0 %v344, 112
    %v1356 = vpop.permute.xlu0 %1355
    %1357 = vrot.lane.b32.xlu0 %v349, 112
    %v1358 = vpop.permute.xlu0 %1357
    %1359 = vrot.lane.b32.xlu0 %v354, 112
    %v1360 = vpop.permute.xlu0 %1359
    %v1361 = vsel %vm812, %v1346, 0
    %v1363 = vsel %vm812, %v1348, 0
    %v1365 = vsel %vm812, %v1350, 0
    %v1367 = vsel %vm812, %v1352, 0
    %v1369 = vsel %vm812, %v1354, 0
    %v1371 = vsel %vm812, %v1356, 0
    %v1373 = vsel %vm812, %v1358, 0
    %v1375 = vsel %vm812, %v1360, 0
    %1377 = vmatprep.subr.mxu0 0.0
    %1378 = vmatpush1.xpose.msra.mxu0 %v1369
    %1379 = vmatprep.subr.mxu0 0.0
    %1380 = vmatpush1.xpose.msra.mxu0 %v1371
    %1381 = vmatprep.subr.mxu0 0.0
    %1382 = vmatpush1.xpose.msra.mxu0 %v1373
    %1383 = vmatprep.subr.mxu0 0.0
    %1384 = vmatpush1.xpose.msra.mxu0 %v1375
    %1385 = vmatprep.subr.mxu0 0.0
    %1386 = vmatpush1.xpose.msra.mxu0 0.0
    %1387 = vmatprep.subr.mxu0 0.0
    %1388 = vmatpush1.xpose.msra.mxu0 0.0
    %1389 = vmatprep.subr.mxu0 0.0
    %1390 = vmatpush1.xpose.msra.mxu0 0.0
    %1391 = vmatprep.subr.mxu0 0.0
    %1392 = vmatpush1.xpose.msra.mxu0 0.0
    %1393 = vmatprep.subr.mxu0 0.0
    %1394 = vmatpush1.xpose.msra.mxu0 0.0
    %1395 = vmatprep.subr.mxu0 0.0
    %1396 = vmatpush1.xpose.msra.mxu0 0.0
    %1397 = vmatprep.subr.mxu0 0.0
    %1398 = vmatpush1.xpose.msra.mxu0 0.0
    %1399 = vmatprep.subr.mxu0 0.0
    %1400 = vmatpush1.xpose.msra.mxu0 0.0
    %1401 = vmatprep.subr.mxu0 0.0
    %1402 = vmatpush1.xpose.msra.mxu0 0.0
    %1403 = vmatprep.subr.mxu0 0.0
    %1404 = vmatpush1.xpose.msra.mxu0 0.0
    %1405 = vmatprep.subr.mxu0 0.0
    %1406 = vmatpush1.xpose.msra.mxu0 0.0
    %1407 = vmatprep.subr.mxu0 0.0
    %1408 = vmatpush1.xpose.msra.mxu0 0.0
    %1409 = vmatprep.subr.mxu0 0.0
    %1410 = vmatpush1.xpose.msra.mxu0 0.0
    %1411 = vmatprep.subr.mxu0 0.0
    %1412 = vmatpush1.xpose.msra.mxu0 0.0
    %1413 = vmatprep.subr.mxu0 0.0
    %1414 = vmatpush1.xpose.msra.mxu0 0.0
    %1415 = vmatprep.subr.mxu0 0.0
    %1416 = vmatpush1.xpose.msra.mxu0 0.0
    %1417 = vmatprep.subr.mxu0 0.0
    %1418 = vmatpush1.xpose.msra.mxu0 0.0
    %1419 = vmatprep.subr.mxu0 0.0
    %1420 = vmatpush1.xpose.msra.mxu0 0.0
    %1421 = vmatprep.subr.mxu0 0.0
    %1422 = vmatpush1.xpose.msra.mxu0 0.0
    %1423 = vmatprep.subr.mxu0 0.0
    %1424 = vmatpush1.xpose.msra.mxu0 0.0
    %1425 = vmatprep.subr.mxu0 0.0
    %1426 = vmatpush1.xpose.msra.mxu0 0.0
    %1427 = vmatprep.subr.mxu0 0.0
    %1428 = vmatpush1.xpose.msra.mxu0 0.0
    %1429 = vmatprep.subr.mxu0 0.0
    %1430 = vmatpush1.xpose.msra.mxu0 0.0
    %1431 = vmatprep.subr.mxu0 0.0
    %1432 = vmatpush1.xpose.msra.mxu0 0.0
    %1433 = vmatprep.subr.mxu0 0.0
    %1434 = vmatpush1.xpose.msra.mxu0 0.0
    %1435 = vmatprep.subr.mxu0 0.0
    %1436 = vmatpush1.xpose.msra.mxu0 0.0
    %1437 = vmatprep.subr.mxu0 0.0
    %1438 = vmatpush1.xpose.msra.mxu0 0.0
    %1439 = vmatprep.subr.mxu0 0.0
    %1440 = vmatpush1.xpose.msra.mxu0 0.0
    %1441 = vmatprep.mubr.f32.mxu0 0.0
    %1442 = vmatmul.mubr.f32.gmra.mrb[0].mxu0 %v1361
    %v1443 = vpop.f32.mrb[0].mxu0
    %v1444 = vadd.f32 %v808, %v1443
    %v1445 = vpop.f32.mrb[0].mxu0
    %1446 = vmatprep.mubr.f32.mxu0 0.0
    %1447 = vmatmul.mubr.f32.gmra.mrb[0].mxu0 %v1363
    %v1448 = vpop.f32.mrb[0].mxu0
    %v1449 = vadd.f32 %v809, %v1448
    %v1450 = vpop.f32.mrb[0].mxu0
    %1451 = vmatprep.mubr.f32.mxu0 0.0
    %1452 = vmatmul.mubr.f32.gmra.mrb[0].mxu0 %v1365
    %v1453 = vpop.f32.mrb[0].mxu0
    %v1454 = vadd.f32 %v810, %v1453
    %v1455 = vpop.f32.mrb[0].mxu0
    %1456 = vmatprep.mubr.f32.mxu0 0.0
    %1457 = vmatmul.mubr.f32.gmra.mrb[0].mxu0 %v1367
    %v1458 = vpop.f32.mrb[0].mxu0
    %v1459 = vadd.f32 %v811, %v1458
    %v1460 = vpop.f32.mrb[0].mxu0
    %1461 = vdwg.mxu0
    %v1462 = vsel %vm259, %v1444, -inf
    %1463 = vmax.xlane.f32.xlu0 %v1462
    %v1464 = vpop.xlane.xlu0 %1463
    %v1465 = vsel %vm259, %v1449, -inf
    %1466 = vmax.xlane.f32.xlu0 %v1465
    %v1467 = vpop.xlane.xlu0 %1466
    %v1468 = vsel %vm259, %v1454, -inf
    %1469 = vmax.xlane.f32.xlu0 %v1468
    %v1470 = vpop.xlane.xlu0 %1469
    %v1471 = vsel %vm259, %v1459, -inf
    %1472 = vmax.xlane.f32.xlu0 %v1471
    %v1473 = vpop.xlane.xlu0 %1472
    %v1474 = vsub.f32 %v1444, %v1464
    %v1475 = vsub.f32 %v1449, %v1467
    %v1476 = vsub.f32 %v1454, %v1470
    %v1477 = vsub.f32 %v1459, %v1473
    %v1478 = vmul.f32 %v1474, 1.442695
    %v1479 = vpow.pop %v1478
    %v1480 = vmul.f32 %v1475, 1.442695
    %v1481 = vpow.pop %v1480
    %v1482 = vmul.f32 %v1476, 1.442695
    %v1483 = vpow.pop %v1482
    %v1484 = vmul.f32 %v1477, 1.442695
    %v1485 = vpow.pop %v1484
    %v1486 = vsel %vm259, %v1479, 0.0
    %1487 = vadd.xlane.f32.xlu0 %v1486
    %v1488 = vpop.xlane.xlu0 %1487
    %v1489 = vsel %vm259, %v1481, 0.0
    %1490 = vadd.xlane.f32.xlu0 %v1489
    %v1491 = vpop.xlane.xlu0 %1490
    %v1492 = vsel %vm259, %v1483, 0.0
    %1493 = vadd.xlane.f32.xlu0 %v1492
    %v1494 = vpop.xlane.xlu0 %1493
    %v1495 = vsel %vm259, %v1485, 0.0
    %1496 = vadd.xlane.f32.xlu0 %v1495
    %v1497 = vpop.xlane.xlu0 %1496
    %v1498 = vrcp.pop %v1488
    %v1499 = vmul.f32 %v1479, %v1498
    %v1500 = vrcp.pop %v1491
    %v1501 = vmul.f32 %v1481, %v1500
    %v1502 = vrcp.pop %v1494
    %v1503 = vmul.f32 %v1483, %v1502
    %v1504 = vrcp.pop %v1497
    %v1505 = vmul.f32 %v1485, %v1504
    %1506 = vrot.lane.b32.xlu0 %v339, 80
    %v1507 = vpop.permute.xlu0 %1506
    %1508 = vrot.lane.b32.xlu0 %v344, 80
    %v1509 = vpop.permute.xlu0 %1508
    %1510 = vrot.lane.b32.xlu0 %v349, 80
    %v1511 = vpop.permute.xlu0 %1510
    %1512 = vrot.lane.b32.xlu0 %v354, 80
    %v1513 = vpop.permute.xlu0 %1512
    %v1519 = vsel %vm259, %v1499, 0
    %v1522 = vsel %vm259, %v1501, 0
    %v1525 = vsel %vm259, %v1503, 0
    %v1528 = vsel %vm259, %v1505, 0
    %1530 = vmatprep.subr.mxu0 0.0
    %1531 = vmatpush1.msra.mxu0 %v1507
    %1532 = vmatprep.subr.mxu0 0.0
    %1533 = vmatpush1.msra.mxu0 %v1509
    %1534 = vmatprep.subr.mxu0 0.0
    %1535 = vmatpush1.msra.mxu0 %v1511
    %1536 = vmatprep.subr.mxu0 0.0
    %1537 = vmatpush1.msra.mxu0 %v1513
    %1538 = vmatprep.subr.mxu0 0.0
    %1539 = vmatpush1.msra.mxu0 0.0
    %1540 = vmatprep.subr.mxu0 0.0
    %1541 = vmatpush1.msra.mxu0 0.0
    %1542 = vmatprep.subr.mxu0 0.0
    %1543 = vmatpush1.msra.mxu0 0.0
    %1544 = vmatprep.subr.mxu0 0.0
    %1545 = vmatpush1.msra.mxu0 0.0
    %1546 = vmatprep.subr.mxu0 0.0
    %1547 = vmatpush1.msra.mxu0 0.0
    %1548 = vmatprep.subr.mxu0 0.0
    %1549 = vmatpush1.msra.mxu0 0.0
    %1550 = vmatprep.subr.mxu0 0.0
    %1551 = vmatpush1.msra.mxu0 0.0
    %1552 = vmatprep.subr.mxu0 0.0
    %1553 = vmatpush1.msra.mxu0 0.0
    %1554 = vmatprep.subr.mxu0 0.0
    %1555 = vmatpush1.msra.mxu0 0.0
    %1556 = vmatprep.subr.mxu0 0.0
    %1557 = vmatpush1.msra.mxu0 0.0
    %1558 = vmatprep.subr.mxu0 0.0
    %1559 = vmatpush1.msra.mxu0 0.0
    %1560 = vmatprep.subr.mxu0 0.0
    %1561 = vmatpush1.msra.mxu0 0.0
    %1562 = vmatprep.subr.mxu0 0.0
    %1563 = vmatpush1.msra.mxu0 0.0
    %1564 = vmatprep.subr.mxu0 0.0
    %1565 = vmatpush1.msra.mxu0 0.0
    %1566 = vmatprep.subr.mxu0 0.0
    %1567 = vmatpush1.msra.mxu0 0.0
    %1568 = vmatprep.subr.mxu0 0.0
    %1569 = vmatpush1.msra.mxu0 0.0
    %1570 = vmatprep.subr.mxu0 0.0
    %1571 = vmatpush1.msra.mxu0 0.0
    %1572 = vmatprep.subr.mxu0 0.0
    %1573 = vmatpush1.msra.mxu0 0.0
    %1574 = vmatprep.subr.mxu0 0.0
    %1575 = vmatpush1.msra.mxu0 0.0
    %1576 = vmatprep.subr.mxu0 0.0
    %1577 = vmatpush1.msra.mxu0 0.0
    %1578 = vmatprep.subr.mxu0 0.0
    %1579 = vmatpush1.msra.mxu0 0.0
    %1580 = vmatprep.subr.mxu0 0.0
    %1581 = vmatpush1.msra.mxu0 0.0
    %1582 = vmatprep.subr.mxu0 0.0
    %1583 = vmatpush1.msra.mxu0 0.0
    %1584 = vmatprep.subr.mxu0 0.0
    %1585 = vmatpush1.msra.mxu0 0.0
    %1586 = vmatprep.subr.mxu0 0.0
    %1587 = vmatpush1.msra.mxu0 0.0
    %1588 = vmatprep.subr.mxu0 0.0
    %1589 = vmatpush1.msra.mxu0 0.0
    %1590 = vmatprep.subr.mxu0 0.0
    %1591 = vmatpush1.msra.mxu0 0.0
    %1592 = vmatprep.subr.mxu0 0.0
    %1593 = vmatpush1.msra.mxu0 0.0
    %1594 = vmatprep.mubr.f32.mxu0 0.0
    %1595 = vmatmul.mubr.f32.gmra.mrb[0].mxu0 %v1519
    %v1596 = vpop.f32.mrb[0].mxu0
    %v1597 = vadd.f32 0.0, %v1596
    %v1598 = vpop.f32.mrb[0].mxu0
    %1599 = vmatprep.mubr.f32.mxu0 0.0
    %1600 = vmatmul.mubr.f32.gmra.mrb[0].mxu0 %v1522
    %v1601 = vpop.f32.mrb[0].mxu0
    %v1602 = vadd.f32 0.0, %v1601
    %v1603 = vpop.f32.mrb[0].mxu0
    %1604 = vmatprep.mubr.f32.mxu0 0.0
    %1605 = vmatmul.mubr.f32.gmra.mrb[0].mxu0 %v1525
    %v1606 = vpop.f32.mrb[0].mxu0
    %v1607 = vadd.f32 0.0, %v1606
    %v1608 = vpop.f32.mrb[0].mxu0
    %1609 = vmatprep.mubr.f32.mxu0 0.0
    %1610 = vmatmul.mubr.f32.gmra.mrb[0].mxu0 %v1528
    %v1611 = vpop.f32.mrb[0].mxu0
    %v1612 = vadd.f32 0.0, %v1611
    %v1613 = vpop.f32.mrb[0].mxu0
    %1614 = vdwg.mxu0
    %1615 = vrot.lane.b32.xlu0 %v804, 104
    %v1616 = vpop.permute.xlu0 %1615
    %1617 = vrot.lane.b32.xlu0 %v805, 104
    %v1618 = vpop.permute.xlu0 %1617
    %1619 = vrot.lane.b32.xlu0 %v806, 104
    %v1620 = vpop.permute.xlu0 %1619
    %1621 = vrot.lane.b32.xlu0 %v807, 104
    %v1622 = vpop.permute.xlu0 %1621
    %1623 = vrot.lane.b32.xlu0 %v339, 104
    %v1624 = vpop.permute.xlu0 %1623
    %1625 = vrot.lane.b32.xlu0 %v344, 104
    %v1626 = vpop.permute.xlu0 %1625
    %1627 = vrot.lane.b32.xlu0 %v349, 104
    %v1628 = vpop.permute.xlu0 %1627
    %1629 = vrot.lane.b32.xlu0 %v354, 104
    %v1630 = vpop.permute.xlu0 %1629
    %v1631 = vsel %vm812, %v1616, 0
    %v1633 = vsel %vm812, %v1618, 0
    %v1635 = vsel %vm812, %v1620, 0
    %v1637 = vsel %vm812, %v1622, 0
    %v1639 = vsel %vm812, %v1624, 0
    %v1641 = vsel %vm812, %v1626, 0
    %v1643 = vsel %vm812, %v1628, 0
    %v1645 = vsel %vm812, %v1630, 0
    %1647 = vmatprep.subr.mxu0 0.0
    %1648 = vmatpush1.xpose.msra.mxu0 %v1639
    %1649 = vmatprep.subr.mxu0 0.0
    %1650 = vmatpush1.xpose.msra.mxu0 %v1641
    %1651 = vmatprep.subr.mxu0 0.0
    %1652 = vmatpush1.xpose.msra.mxu0 %v1643
    %1653 = vmatprep.subr.mxu0 0.0
    %1654 = vmatpush1.xpose.msra.mxu0 %v1645
    %1655 = vmatprep.subr.mxu0 0.0
    %1656 = vmatpush1.xpose.msra.mxu0 0.0
    %1657 = vmatprep.subr.mxu0 0.0
    %1658 = vmatpush1.xpose.msra.mxu0 0.0
    %1659 = vmatprep.subr.mxu0 0.0
    %1660 = vmatpush1.xpose.msra.mxu0 0.0
    %1661 = vmatprep.subr.mxu0 0.0
    %1662 = vmatpush1.xpose.msra.mxu0 0.0
    %1663 = vmatprep.subr.mxu0 0.0
    %1664 = vmatpush1.xpose.msra.mxu0 0.0
    %1665 = vmatprep.subr.mxu0 0.0
    %1666 = vmatpush1.xpose.msra.mxu0 0.0
    %1667 = vmatprep.subr.mxu0 0.0
    %1668 = vmatpush1.xpose.msra.mxu0 0.0
    %1669 = vmatprep.subr.mxu0 0.0
    %1670 = vmatpush1.xpose.msra.mxu0 0.0
    %1671 = vmatprep.subr.mxu0 0.0
    %1672 = vmatpush1.xpose.msra.mxu0 0.0
    %1673 = vmatprep.subr.mxu0 0.0
    %1674 = vmatpush1.xpose.msra.mxu0 0.0
    %1675 = vmatprep.subr.mxu0 0.0
    %1676 = vmatpush1.xpose.msra.mxu0 0.0
    %1677 = vmatprep.subr.mxu0 0.0
    %1678 = vmatpush1.xpose.msra.mxu0 0.0
    %1679 = vmatprep.subr.mxu0 0.0
    %1680 = vmatpush1.xpose.msra.mxu0 0.0
    %1681 = vmatprep.subr.mxu0 0.0
    %1682 = vmatpush1.xpose.msra.mxu0 0.0
    %1683 = vmatprep.subr.mxu0 0.0
    %1684 = vmatpush1.xpose.msra.mxu0 0.0
    %1685 = vmatprep.subr.mxu0 0.0
    %1686 = vmatpush1.xpose.msra.mxu0 0.0
    %1687 = vmatprep.subr.mxu0 0.0
    %1688 = vmatpush1.xpose.msra.mxu0 0.0
    %1689 = vmatprep.subr.mxu0 0.0
    %1690 = vmatpush1.xpose.msra.mxu0 0.0
    %1691 = vmatprep.subr.mxu0 0.0
    %1692 = vmatpush1.xpose.msra.mxu0 0.0
    %1693 = vmatprep.subr.mxu0 0.0
    %1694 = vmatpush1.xpose.msra.mxu0 0.0
    %1695 = vmatprep.subr.mxu0 0.0
    %1696 = vmatpush1.xpose.msra.mxu0 0.0
    %1697 = vmatprep.subr.mxu0 0.0
    %1698 = vmatpush1.xpose.msra.mxu0 0.0
    %1699 = vmatprep.subr.mxu0 0.0
    %1700 = vmatpush1.xpose.msra.mxu0 0.0
    %1701 = vmatprep.subr.mxu0 0.0
    %1702 = vmatpush1.xpose.msra.mxu0 0.0
    %1703 = vmatprep.subr.mxu0 0.0
    %1704 = vmatpush1.xpose.msra.mxu0 0.0
    %1705 = vmatprep.subr.mxu0 0.0
    %1706 = vmatpush1.xpose.msra.mxu0 0.0
    %1707 = vmatprep.subr.mxu0 0.0
    %1708 = vmatpush1.xpose.msra.mxu0 0.0
    %1709 = vmatprep.subr.mxu0 0.0
    %1710 = vmatpush1.xpose.msra.mxu0 0.0
    %1711 = vmatprep.mubr.f32.mxu0 0.0
    %1712 = vmatmul.mubr.f32.gmra.mrb[0].mxu0 %v1631
    %v1713 = vpop.f32.mrb[0].mxu0
    %v1714 = vadd.f32 %v808, %v1713
    %v1715 = vpop.f32.mrb[0].mxu0
    %1716 = vmatprep.mubr.f32.mxu0 0.0
    %1717 = vmatmul.mubr.f32.gmra.mrb[0].mxu0 %v1633
    %v1718 = vpop.f32.mrb[0].mxu0
    %v1719 = vadd.f32 %v809, %v1718
    %v1720 = vpop.f32.mrb[0].mxu0
    %1721 = vmatprep.mubr.f32.mxu0 0.0
    %1722 = vmatmul.mubr.f32.gmra.mrb[0].mxu0 %v1635
    %v1723 = vpop.f32.mrb[0].mxu0
    %v1724 = vadd.f32 %v810, %v1723
    %v1725 = vpop.f32.mrb[0].mxu0
    %1726 = vmatprep.mubr.f32.mxu0 0.0
    %1727 = vmatmul.mubr.f32.gmra.mrb[0].mxu0 %v1637
    %v1728 = vpop.f32.mrb[0].mxu0
    %v1729 = vadd.f32 %v811, %v1728
    %v1730 = vpop.f32.mrb[0].mxu0
    %1731 = vdwg.mxu0
    %v1732 = vsel %vm259, %v1714, -inf
    %1733 = vmax.xlane.f32.xlu0 %v1732
    %v1734 = vpop.xlane.xlu0 %1733
    %v1735 = vsel %vm259, %v1719, -inf
    %1736 = vmax.xlane.f32.xlu0 %v1735
    %v1737 = vpop.xlane.xlu0 %1736
    %v1738 = vsel %vm259, %v1724, -inf
    %1739 = vmax.xlane.f32.xlu0 %v1738
    %v1740 = vpop.xlane.xlu0 %1739
    %v1741 = vsel %vm259, %v1729, -inf
    %1742 = vmax.xlane.f32.xlu0 %v1741
    %v1743 = vpop.xlane.xlu0 %1742
    %v1744 = vsub.f32 %v1714, %v1734
    %v1745 = vsub.f32 %v1719, %v1737
    %v1746 = vsub.f32 %v1724, %v1740
    %v1747 = vsub.f32 %v1729, %v1743
    %v1748 = vmul.f32 %v1744, 1.442695
    %v1749 = vpow.pop %v1748
    %v1750 = vmul.f32 %v1745, 1.442695
    %v1751 = vpow.pop %v1750
    %v1752 = vmul.f32 %v1746, 1.442695
    %v1753 = vpow.pop %v1752
    %v1754 = vmul.f32 %v1747, 1.442695
    %v1755 = vpow.pop %v1754
    %v1756 = vsel %vm259, %v1749, 0.0
    %1757 = vadd.xlane.f32.xlu0 %v1756
    %v1758 = vpop.xlane.xlu0 %1757
    %v1759 = vsel %vm259, %v1751, 0.0
    %1760 = vadd.xlane.f32.xlu0 %v1759
    %v1761 = vpop.xlane.xlu0 %1760
    %v1762 = vsel %vm259, %v1753, 0.0
    %1763 = vadd.xlane.f32.xlu0 %v1762
    %v1764 = vpop.xlane.xlu0 %1763
    %v1765 = vsel %vm259, %v1755, 0.0
    %1766 = vadd.xlane.f32.xlu0 %v1765
    %v1767 = vpop.xlane.xlu0 %1766
    %v1768 = vrcp.pop %v1758
    %v1769 = vmul.f32 %v1749, %v1768
    %v1770 = vrcp.pop %v1761
    %v1771 = vmul.f32 %v1751, %v1770
    %v1772 = vrcp.pop %v1764
    %v1773 = vmul.f32 %v1753, %v1772
    %v1774 = vrcp.pop %v1767
    %v1775 = vmul.f32 %v1755, %v1774
    %1776 = vrot.lane.b32.xlu0 %v339, 72
    %v1777 = vpop.permute.xlu0 %1776
    %1778 = vrot.lane.b32.xlu0 %v344, 72
    %v1779 = vpop.permute.xlu0 %1778
    %1780 = vrot.lane.b32.xlu0 %v349, 72
    %v1781 = vpop.permute.xlu0 %1780
    %1782 = vrot.lane.b32.xlu0 %v354, 72
    %v1783 = vpop.permute.xlu0 %1782
    %v1789 = vsel %vm259, %v1769, 0
    %v1792 = vsel %vm259, %v1771, 0
    %v1795 = vsel %vm259, %v1773, 0
    %v1798 = vsel %vm259, %v1775, 0
    %1800 = vmatprep.subr.mxu0 0.0
    %1801 = vmatpush1.msra.mxu0 %v1777
    %1802 = vmatprep.subr.mxu0 0.0
    %1803 = vmatpush1.msra.mxu0 %v1779
    %1804 = vmatprep.subr.mxu0 0.0
    %1805 = vmatpush1.msra.mxu0 %v1781
    %1806 = vmatprep.subr.mxu0 0.0
    %1807 = vmatpush1.msra.mxu0 %v1783
    %1808 = vmatprep.subr.mxu0 0.0
    %1809 = vmatpush1.msra.mxu0 0.0
    %1810 = vmatprep.subr.mxu0 0.0
    %1811 = vmatpush1.msra.mxu0 0.0
    %1812 = vmatprep.subr.mxu0 0.0
    %1813 = vmatpush1.msra.mxu0 0.0
    %1814 = vmatprep.subr.mxu0 0.0
    %1815 = vmatpush1.msra.mxu0 0.0
    %1816 = vmatprep.subr.mxu0 0.0
    %1817 = vmatpush1.msra.mxu0 0.0
    %1818 = vmatprep.subr.mxu0 0.0
    %1819 = vmatpush1.msra.mxu0 0.0
    %1820 = vmatprep.subr.mxu0 0.0
    %1821 = vmatpush1.msra.mxu0 0.0
    %1822 = vmatprep.subr.mxu0 0.0
    %1823 = vmatpush1.msra.mxu0 0.0
    %1824 = vmatprep.subr.mxu0 0.0
    %1825 = vmatpush1.msra.mxu0 0.0
    %1826 = vmatprep.subr.mxu0 0.0
    %1827 = vmatpush1.msra.mxu0 0.0
    %1828 = vmatprep.subr.mxu0 0.0
    %1829 = vmatpush1.msra.mxu0 0.0
    %1830 = vmatprep.subr.mxu0 0.0
    %1831 = vmatpush1.msra.mxu0 0.0
    %1832 = vmatprep.subr.mxu0 0.0
    %1833 = vmatpush1.msra.mxu0 0.0
    %1834 = vmatprep.subr.mxu0 0.0
    %1835 = vmatpush1.msra.mxu0 0.0
    %1836 = vmatprep.subr.mxu0 0.0
    %1837 = vmatpush1.msra.mxu0 0.0
    %1838 = vmatprep.subr.mxu0 0.0
    %1839 = vmatpush1.msra.mxu0 0.0
    %1840 = vmatprep.subr.mxu0 0.0
    %1841 = vmatpush1.msra.mxu0 0.0
    %1842 = vmatprep.subr.mxu0 0.0
    %1843 = vmatpush1.msra.mxu0 0.0
    %1844 = vmatprep.subr.mxu0 0.0
    %1845 = vmatpush1.msra.mxu0 0.0
    %1846 = vmatprep.subr.mxu0 0.0
    %1847 = vmatpush1.msra.mxu0 0.0
    %1848 = vmatprep.subr.mxu0 0.0
    %1849 = vmatpush1.msra.mxu0 0.0
    %1850 = vmatprep.subr.mxu0 0.0
    %1851 = vmatpush1.msra.mxu0 0.0
    %1852 = vmatprep.subr.mxu0 0.0
    %1853 = vmatpush1.msra.mxu0 0.0
    %1854 = vmatprep.subr.mxu0 0.0
    %1855 = vmatpush1.msra.mxu0 0.0
    %1856 = vmatprep.subr.mxu0 0.0
    %1857 = vmatpush1.msra.mxu0 0.0
    %1858 = vmatprep.subr.mxu0 0.0
    %1859 = vmatpush1.msra.mxu0 0.0
    %1860 = vmatprep.subr.mxu0 0.0
    %1861 = vmatpush1.msra.mxu0 0.0
    %1862 = vmatprep.subr.mxu0 0.0
    %1863 = vmatpush1.msra.mxu0 0.0
    %1864 = vmatprep.mubr.f32.mxu0 0.0
    %1865 = vmatmul.mubr.f32.gmra.mrb[0].mxu0 %v1789
    %v1866 = vpop.f32.mrb[0].mxu0
    %v1867 = vadd.f32 0.0, %v1866
    %v1868 = vpop.f32.mrb[0].mxu0
    %1869 = vmatprep.mubr.f32.mxu0 0.0
    %1870 = vmatmul.mubr.f32.gmra.mrb[0].mxu0 %v1792
    %v1871 = vpop.f32.mrb[0].mxu0
    %v1872 = vadd.f32 0.0, %v1871
    %v1873 = vpop.f32.mrb[0].mxu0
    %1874 = vmatprep.mubr.f32.mxu0 0.0
    %1875 = vmatmul.mubr.f32.gmra.mrb[0].mxu0 %v1795
    %v1876 = vpop.f32.mrb[0].mxu0
    %v1877 = vadd.f32 0.0, %v1876
    %v1878 = vpop.f32.mrb[0].mxu0
    %1879 = vmatprep.mubr.f32.mxu0 0.0
    %1880 = vmatmul.mubr.f32.gmra.mrb[0].mxu0 %v1798
    %v1881 = vpop.f32.mrb[0].mxu0
    %v1882 = vadd.f32 0.0, %v1881
    %v1883 = vpop.f32.mrb[0].mxu0
    %1884 = vdwg.mxu0
    %1889 = vrot.lane.b32.xlu0 %v1327, 8
    %v1890 = vpop.permute.xlu0 %1889
    %1891 = vrot.lane.b32.xlu0 %v1332, 8
    %v1892 = vpop.permute.xlu0 %1891
    %1893 = vrot.lane.b32.xlu0 %v1337, 8
    %v1894 = vpop.permute.xlu0 %1893
    %1895 = vrot.lane.b32.xlu0 %v1342, 8
    %v1896 = vpop.permute.xlu0 %1895
    %1905 = vrot.lane.b32.xlu0 %v1597, 16
    %v1906 = vpop.permute.xlu0 %1905
    %1907 = vrot.lane.b32.xlu0 %v1602, 16
    %v1908 = vpop.permute.xlu0 %1907
    %1909 = vrot.lane.b32.xlu0 %v1607, 16
    %v1910 = vpop.permute.xlu0 %1909
    %1911 = vrot.lane.b32.xlu0 %v1612, 16
    %v1912 = vpop.permute.xlu0 %1911
    %1921 = vrot.lane.b32.xlu0 %v1867, 24
    %v1922 = vpop.permute.xlu0 %1921
    %1923 = vrot.lane.b32.xlu0 %v1872, 24
    %v1924 = vpop.permute.xlu0 %1923
    %1925 = vrot.lane.b32.xlu0 %v1877, 24
    %v1926 = vpop.permute.xlu0 %1925
    %1927 = vrot.lane.b32.xlu0 %v1882, 24
    %v1928 = vpop.permute.xlu0 %1927
    %v1933 = vsel %vm812, %v1057, %v1890
    %v1934 = vsel %vm812, %v1062, %v1892
    %v1935 = vsel %vm812, %v1067, %v1894
    %v1936 = vsel %vm812, %v1072, %v1896
    %v1937 = vsel %vm515, %v1933, %v1906
    %v1938 = vsel %vm515, %v1934, %v1908
    %v1939 = vsel %vm515, %v1935, %v1910
    %v1940 = vsel %vm515, %v1936, %v1912
    %vm1941 = vcmask 195584
    %v1942 = vsel %vm1941, %v1937, %v1922
    %v1943 = vsel %vm1941, %v1938, %v1924
    %v1944 = vsel %vm1941, %v1939, %v1926
    %v1945 = vsel %vm1941, %v1940, %v1928
    %v1946 = vld [vmem:[#allocation2 + $0xd0] sm:$0xff]
    %v1947 = vld [vmem:[#allocation2 + $0xd8] sm:$0xff]
    %v1948 = vld [vmem:[#allocation2 + $0xe0] sm:$0xff]
    %v1949 = vld [vmem:[#allocation2 + $0xe8] sm:$0xff]
    %v1950 = vld [vmem:[#allocation2 + $0xf0] sm:$0x1]
    %v1951 = vlaneseq
    %v1952 = vshrl.u32 %v1951, 7
    %v1953 = vsub.s32 0, %v1952
    %v1954 = vrot.slane %v1950, %v1953
    %v1956 = vsel %vm259, %v1942, 0
    %v1959 = vsel %vm259, %v1943, 0
    %v1962 = vsel %vm259, %v1944, 0
    %v1965 = vsel %vm259, %v1945, 0
    %1967 = vmatprep.subr.mxu0 0.0
    %1968 = vmatpush1.msra.mxu0 %v1946
    %1969 = vmatprep.subr.mxu0 0.0
    %1970 = vmatpush1.msra.mxu0 %v1947
    %1971 = vmatprep.subr.mxu0 0.0
    %1972 = vmatpush1.msra.mxu0 %v1948
    %1973 = vmatprep.subr.mxu0 0.0
    %1974 = vmatpush1.msra.mxu0 %v1949
    %1975 = vmatprep.subr.mxu0 0.0
    %1976 = vmatpush1.msra.mxu0 0.0
    %1977 = vmatprep.subr.mxu0 0.0
    %1978 = vmatpush1.msra.mxu0 0.0
    %1979 = vmatprep.subr.mxu0 0.0
    %1980 = vmatpush1.msra.mxu0 0.0
    %1981 = vmatprep.subr.mxu0 0.0
    %1982 = vmatpush1.msra.mxu0 0.0
    %1983 = vmatprep.subr.mxu0 0.0
    %1984 = vmatpush1.msra.mxu0 0.0
    %1985 = vmatprep.subr.mxu0 0.0
    %1986 = vmatpush1.msra.mxu0 0.0
    %1987 = vmatprep.subr.mxu0 0.0
    %1988 = vmatpush1.msra.mxu0 0.0
    %1989 = vmatprep.subr.mxu0 0.0
    %1990 = vmatpush1.msra.mxu0 0.0
    %1991 = vmatprep.subr.mxu0 0.0
    %1992 = vmatpush1.msra.mxu0 0.0
    %1993 = vmatprep.subr.mxu0 0.0
    %1994 = vmatpush1.msra.mxu0 0.0
    %1995 = vmatprep.subr.mxu0 0.0
    %1996 = vmatpush1.msra.mxu0 0.0
    %1997 = vmatprep.subr.mxu0 0.0
    %1998 = vmatpush1.msra.mxu0 0.0
    %1999 = vmatprep.subr.mxu0 0.0
    %2000 = vmatpush1.msra.mxu0 0.0
    %2001 = vmatprep.subr.mxu0 0.0
    %2002 = vmatpush1.msra.mxu0 0.0
    %2003 = vmatprep.subr.mxu0 0.0
    %2004 = vmatpush1.msra.mxu0 0.0
    %2005 = vmatprep.subr.mxu0 0.0
    %2006 = vmatpush1.msra.mxu0 0.0
    %2007 = vmatprep.subr.mxu0 0.0
    %2008 = vmatpush1.msra.mxu0 0.0
    %2009 = vmatprep.subr.mxu0 0.0
    %2010 = vmatpush1.msra.mxu0 0.0
    %2011 = vmatprep.subr.mxu0 0.0
    %2012 = vmatpush1.msra.mxu0 0.0
    %2013 = vmatprep.subr.mxu0 0.0
    %2014 = vmatpush1.msra.mxu0 0.0
    %2015 = vmatprep.subr.mxu0 0.0
    %2016 = vmatpush1.msra.mxu0 0.0
    %2017 = vmatprep.subr.mxu0 0.0
    %2018 = vmatpush1.msra.mxu0 0.0
    %2019 = vmatprep.subr.mxu0 0.0
    %2020 = vmatpush1.msra.mxu0 0.0
    %2021 = vmatprep.subr.mxu0 0.0
    %2022 = vmatpush1.msra.mxu0 0.0
    %2023 = vmatprep.subr.mxu0 0.0
    %2024 = vmatpush1.msra.mxu0 0.0
    %2025 = vmatprep.subr.mxu0 0.0
    %2026 = vmatpush1.msra.mxu0 0.0
    %2027 = vmatprep.subr.mxu0 0.0
    %2028 = vmatpush1.msra.mxu0 0.0
    %2029 = vmatprep.subr.mxu0 0.0
    %2030 = vmatpush1.msra.mxu0 0.0
    %2031 = vmatprep.mubr.f32.mxu0 0.0
    %2032 = vmatmul.mubr.f32.gmra.mrb[0].mxu0 %v1956
    %v2033 = vpop.f32.mrb[0].mxu0
    %v2034 = vadd.f32 %v1954, %v2033
    %v2035 = vpop.f32.mrb[0].mxu0
    %2036 = vmatprep.mubr.f32.mxu0 0.0
    %2037 = vmatmul.mubr.f32.gmra.mrb[0].mxu0 %v1959
    %v2038 = vpop.f32.mrb[0].mxu0
    %v2039 = vadd.f32 %v1954, %v2038
    %v2040 = vpop.f32.mrb[0].mxu0
    %2041 = vmatprep.mubr.f32.mxu0 0.0
    %2042 = vmatmul.mubr.f32.gmra.mrb[0].mxu0 %v1962
    %v2043 = vpop.f32.mrb[0].mxu0
    %v2044 = vadd.f32 %v1954, %v2043
    %v2045 = vpop.f32.mrb[0].mxu0
    %2046 = vmatprep.mubr.f32.mxu0 0.0
    %2047 = vmatmul.mubr.f32.gmra.mrb[0].mxu0 %v1965
    %v2048 = vpop.f32.mrb[0].mxu0
    %v2049 = vadd.f32 %v1954, %v2048
    %v2050 = vpop.f32.mrb[0].mxu0
    %2051 = vdwg.mxu0
    %2052 = vst [vmem:[%s2] sm:$0xff] %v2034
    %2053 = vst [vmem:[%s2 + $0x8] sm:$0xff] %v2039
    %2054 = vst [vmem:[%s2 + $0x10] sm:$0xff] %v2044
    %2055 = vst [vmem:[%s2 + $0x18] sm:$0xff] %v2049
    %v2056 = vsub.f32 %v2034, %v28
    %v2057 = vsub.f32 %v2039, %v29
    %v2058 = vsub.f32 %v2044, %v30
    %v2059 = vsub.f32 %v2049, %v31
    %v2060 = vmul.f32 %v2056, %v2056
    %v2061 = vmul.f32 %v2057, %v2057
    %v2062 = vmul.f32 %v2058, %v2058
    %v2063 = vmul.f32 %v2059, %v2059
    %v2064 = vsel %vm38, %v2060, 0.0
    %v2065 = vsel %vm38, %v2061, 0.0
    %v2066 = vadd.f32 %v2064, %v2065
    %v2067 = vsel %vm38, %v2062, 0.0
    %v2068 = vadd.f32 %v2066, %v2067
    %v2069 = vsel %vm38, %v2063, 0.0
    %v2070 = vadd.f32 %v2068, %v2069
    %2071 = vadd.xlane.f32.xlu0 %v2070
    %v2072 = vpop.xlane.xlu0 %2071
    %v2073 = vrot.slane %v2072, 4
    %v2074 = vadd.f32 %v2072, %v2073
    %v2075 = vrot.slane %v2074, 2
    %v2076 = vadd.f32 %v2074, %v2075
    %v2077 = vrot.slane %v2076, 1
    %v2078 = vadd.f32 %v2076, %v2077
    %s2079 = vtos %v2078
    %s2080 = smul.f32 %s2079, 0.0078125
    %s2081 = scalar_lea.smem [#allocation5], 0
    %2082 = sst [smem:[%s2081]] %s2080
    // Predicated region
    $region14: #{tdr_forward.1} parent=1 // pred_check
      _
    $region15: #{tdr_forward.1} parent=1 // pred_check_branch
      %2084 = sbr.rel (0) target = $region17
    $region16: #{tdr_forward.1} parent=1 // pred_region
      _
    $region17: #{tdr_forward.1} parent=1 // pred_fallthru
      _
    // Predicated region
    $region18: #{tdr_forward.1} parent=1 // pred_check
      _
    $region19: #{tdr_forward.1} parent=1 // pred_check_branch
      %2086 = sbr.rel (0) target = $region21
    $region20: #{tdr_forward.1} parent=1 // pred_region
      %s2088 = ssub.s32 16, 16
      %2089 = vsyncadd [#allocation4], %s2088
      %2092 = dma.smem_to_hbm [#allocation5], 16, %s3, [#allocation4]
    $region21: #{tdr_forward.1} parent=1 // pred_fallthru
      _
    // Predicated region
    $region22: #{tdr_forward.1} parent=1 // pred_check
      _
    $region23: #{tdr_forward.1} parent=1 // pred_check_branch
      %2094 = sbr.rel (0) target = $region25
    $region24: #{tdr_forward.1} parent=1 // pred_region
      _
    $region25: #{tdr_forward.1} parent=1 // pred_fallthru
      _
    // Predicated region
    $region26: #{tdr_forward.1} parent=1 // pred_check
      _
    $region27: #{tdr_forward.1} parent=1 // pred_check_branch
      %2096 = sbr.rel (0) target = $region29
    $region28: #{tdr_forward.1} parent=1 // pred_region
      %2097 = dma.done [#allocation4], 16
    $region29: #{tdr_forward.1} parent=1 // pred_fallthru
      _
    %2098 = sfence
    %2099 = vsyncpa [#allocation3], 1
    %2100 = vsyncpa [#allocation4], 1

</llo_original>
